<compile_context>
chip_gen: v7x
topology: tpu7x:2x2x1
jax: 0.10.0
libtpu: 0.0.40
codegen_flags: <defaults>
</compile_context>

<pallas_src>
import jax
import jax.numpy as jnp
from jax import lax
from jax.experimental import pallas as pl
from jax.experimental.pallas import tpu as pltpu


# ----------------------------------------------------------------------------
# Fused kernel: 3 x (conv3x3 stride-2 'same' + bias + ReLU) + global avg pool
# ----------------------------------------------------------------------------
def _bblock_lowf_kernel(x_ref,
                        t1_ref, b1_ref,
                        t2_ref, b2_ref,
                        t3_ref, b3_ref,
                        pool_ref, o_ref,
                        buf1, buf2, buf3):
    """Processes NB images per grid step.

    Layout: activations are row-flattened, a[h, w*C + c].  Each scratch buffer
    holds NB per-image blocks of (Hin + 2) rows:
        row 0        : zero top halo (conv 'same' padding row -1)
        rows 1..Hin  : the activation rows
        row Hin + 1  : zero pad row (only ever feeds discarded garbage rows)
    For a 3x3 / stride-2 / pad-1 conv, output row i only needs padded rows
    2i, 2i+1, 2i+2, so each conv reads the buffer back as the even and odd row
    slabs (strided pl.ds reads) and runs 3 band matmuls:
        out = even[:-1] @ T0 + odd[:-1] @ T1 + even[1:] @ T2
    Rows at per-image offset Ho of the result straddle an image boundary and
    are garbage; they are simply never read downstream.
    """
    nb, h0, _ = x_ref.shape

    def zero_halo_rows(buf, p):
        z = jnp.zeros((1, buf.shape[1]), dtype=buf.dtype)
        for j in range(nb):
            buf[j * p: j * p + 1, :] = z              # top halo (read as zeros)
            buf[j * p + p - 1: j * p + p, :] = z      # pad row (garbage rows only)

    def conv3x3_s2_relu(buf, p, t_ref, b_ref):
        m2 = (nb * p) // 2                        # = NB * (Ho + 1)
        ev = buf[pl.ds(0, m2, stride=2), :]       # padded rows 0,2,...,Hin   per image
        od = buf[pl.ds(1, m2, stride=2), :]       # padded rows 1,3,...,Hin+1 per image
        s = jnp.dot(ev[:m2 - 1], t_ref[0], preferred_element_type=jnp.float32)
        s = s + jnp.dot(od[:m2 - 1], t_ref[1], preferred_element_type=jnp.float32)
        s = s + jnp.dot(ev[1:], t_ref[2], preferred_element_type=jnp.float32)
        return jnp.maximum(s + b_ref[...], 0.0)   # (NB*(Ho+1)-1, Wo*Cout)

    def stage(dst, p_dst, src, p_src, h_rows):
        # Copy each image's h_rows valid rows into dst's interior rows.
        for j in range(nb):
            dst[j * p_dst + 1: j * p_dst + 1 + h_rows, :] = (
                src[j * p_src: j * p_src + h_rows, :].astype(dst.dtype))

    p1 = buf1.shape[0] // nb
    p2 = buf2.shape[0] // nb
    p3 = buf3.shape[0] // nb
    h1, h2 = p2 - 2, p3 - 2
    h3 = h2 // 2

    zero_halo_rows(buf1, p1)
    zero_halo_rows(buf2, p2)
    zero_halo_rows(buf3, p3)

    # Layer-1 input staging: NB contiguous row-block copies (no wrapper pad).
    for j in range(nb):
        buf1[j * p1 + 1: j * p1 + 1 + h0, :] = x_ref[j].astype(buf1.dtype)

    a1 = conv3x3_s2_relu(buf1, p1, t1_ref, b1_ref)   # per-image row period h1+1
    stage(buf2, p2, a1, h1 + 1, h1)
    a2 = conv3x3_s2_relu(buf2, p2, t2_ref, b2_ref)   # per-image row period h2+1
    stage(buf3, p3, a2, h2 + 1, h2)
    a3 = conv3x3_s2_relu(buf3, p3, t3_ref, b3_ref)   # per-image row period h3+1

    # Global average pool + flatten -> one lane-dense (NB, C_out) store.
    rowsums = jnp.concatenate(
        [jnp.sum(a3[j * (h3 + 1): j * (h3 + 1) + h3, :], axis=0, keepdims=True)
         for j in range(nb)], axis=0)                               # (NB, W3*C3)
    pooled = jnp.dot(rowsums, pool_ref[...], preferred_element_type=jnp.float32)
    o_ref[0] = pooled.astype(o_ref.dtype)


# ----------------------------------------------------------------------------
# Wrapper-side constant matrices (plain JAX, built ONCE via prepare_bblock_lowf)
# ----------------------------------------------------------------------------
def _layer_matrices(w, b, win):
    """Constants for a 3x3 / stride-2 / pad-1 conv on row-flattened activations.

    w: (3, 3, Cin, Cout) HWIO, b: (Cout,).  Returns (t, bt):
      t : (3, Win*Cin, Wo*Cout)  block-Toeplitz kernel-row matrices with the
                                 zero W-halo and stride-2 column subsampling
                                 folded in,
      bt: (1, Wo*Cout)           bias tiled across the Wo output columns.
    """
    n_kh, n_kw, cin, cout = w.shape
    wo = win // 2
    w = w.astype(jnp.float32)
    # stride-2 column subsampling: (Win*Cout, Wo*Cout)
    s_col = jax.nn.one_hot(2 * jnp.arange(wo), win, dtype=jnp.float32).T
    s = jnp.kron(s_col, jnp.eye(cout, dtype=jnp.float32))
    ts = []
    for kh in range(n_kh):
        t = jnp.zeros((win * cin, win * cout), jnp.float32)
        for kw in range(n_kw):
            # output column block v reads input column block v + (kw - 1);
            # out-of-range blocks are dropped == zero 'same' padding.
            e = jnp.eye(win, k=1 - kw, dtype=jnp.float32)
            t = t + jnp.kron(e, w[kh, kw])
        ts.append(t @ s)
    bt = jnp.tile(b.astype(jnp.float32), (wo,)).reshape(1, wo * cout)
    return jnp.stack(ts, axis=0), bt


def prepare_bblock_lowf(params, h0, w0):
    """Build all kernel constants once (hoisted out of the per-forward path).

    params = [(w, b)] * 3 with w in HWIO layout (3, 3, Cin_l, Cout_l).
    """
    assert h0 % 8 == 0 and w0 % 8 == 0, "H, W must be multiples of 8 (3 stride-2 convs)"
    t1, bt1 = _layer_matrices(params[0][0], params[0][1], w0)
    t2, bt2 = _layer_matrices(params[1][0], params[1][1], w0 // 2)
    t3, bt3 = _layer_matrices(params[2][0], params[2][1], w0 // 4)
    c3 = params[2][0].shape[-1]
    h3, w3 = h0 // 8, w0 // 8
    # global-average-pool matrix: (W3*C3, C3), entries 1/(H3*W3)
    pool = jnp.kron(jnp.ones((w3, 1), jnp.float32),
                    jnp.eye(c3, dtype=jnp.float32)) / float(h3 * w3)
    return dict(t1=t1, bt1=bt1, t2=t2, bt2=bt2, t3=t3, bt3=bt3, pool=pool)


def _pick_images_per_step(n):
    # Largest NB dividing N that still leaves >= 2 grid steps (v7x has 2
    # TensorCores sharding the parallel grid axis); fall back to NB = 1.
    for cand in (8, 4, 2):
        if n % cand == 0 and n // cand >= 2:
            return cand
    return 1


def bblock_lowf_forward(x_nchw, consts, nb=None):
    """Pallas TPU implementation of BBlock_LowF.forward (bn=False, act=ReLU).

    x_nchw: (N, C_in, H, W);  consts = prepare_bblock_lowf(params, H, W).
    Returns (N, C_out).
    """
    n, c0, h0, w0 = x_nchw.shape
    if nb is None:
        nb = _pick_images_per_step(n)
    assert n % nb == 0, (n, nb)

    k0 = w0 * c0
    k1 = consts["t1"].shape[2]
    k2 = consts["t2"].shape[2]
    c3 = consts["pool"].shape[1]
    h1, h2 = h0 // 2, h0 // 4
    assert consts["t1"].shape[1] == k0, "consts were built for a different H/W/C_in"

    # NCHW -> row-flattened NHWC (N, H, W*C): a free layout op outside the
    # kernel that also makes the HBM->VMEM input load lane-dense.
    x_flat = jnp.transpose(x_nchw, (0, 2, 3, 1)).reshape(n, h0, k0)

    def resident(a):  # VMEM-resident, single-buffered constant operand
        nd = a.ndim
        imap = lambda b, _nd=nd: (0,) * _nd
        try:
            return pl.BlockSpec(a.shape, imap, pipeline_mode=pl.Buffered(1))
        except TypeError:   # defensive: older BlockSpec without pipeline_mode
            return pl.BlockSpec(a.shape, imap)

    # Right-size the scoped-VMEM request (leave headroom for other fusions).
    itemsize = 4
    const_bytes = sum(int(consts[key].size) * itemsize for key in consts)
    scratch_bytes = itemsize * nb * ((h0 + 2) * k0 + (h1 + 2) * k1 + (h2 + 2) * k2)
    io_bytes = 2 * nb * h0 * k0 * x_flat.dtype.itemsize + 2 * nb * c3 * itemsize
    vmem_limit = int(max(8 * 1024 * 1024, 2 * (const_bytes + scratch_bytes + io_bytes)))

    out = pl.pallas_call(
        _bblock_lowf_kernel,
        out_shape=jax.ShapeDtypeStruct((n // nb, nb, c3), x_nchw.dtype),
        grid_spec=pltpu.PrefetchScalarGridSpec(
            num_scalar_prefetch=0,
            grid=(n // nb,),
            in_specs=[
                pl.BlockSpec((nb, h0, k0), lambda b: (b, 0, 0)),
                resident(consts["t1"]), resident(consts["bt1"]),
                resident(consts["t2"]), resident(consts["bt2"]),
                resident(consts["t3"]), resident(consts["bt3"]),
                resident(consts["pool"]),
            ],
            out_specs=pl.BlockSpec((1, nb, c3), lambda b: (b, 0, 0)),
            scratch_shapes=[
                pltpu.VMEM((nb * (h0 + 2), k0), jnp.float32),
                pltpu.VMEM((nb * (h1 + 2), k1), jnp.float32),
                pltpu.VMEM((nb * (h2 + 2), k2), jnp.float32),
            ],
        ),
        compiler_params=pltpu.CompilerParams(
            dimension_semantics=("parallel",),
            vmem_limit_bytes=vmem_limit,
        ),
    )(x_flat,
      consts["t1"], consts["bt1"],
      consts["t2"], consts["bt2"],
      consts["t3"], consts["bt3"],
      consts["pool"])
    return out.reshape(n, c3)


# ----------------------------------------------------------------------------
# Pure-JAX reference for validation
# ----------------------------------------------------------------------------
def bblock_lowf_ref(x_nchw, params):
    x = x_nchw
    for w, b in params:
        w_oihw = jnp.transpose(w, (3, 2, 0, 1))
        x = lax.conv_general_dilated(
            x, w_oihw, window_strides=(2, 2), padding=((1, 1), (1, 1)),
            dimension_numbers=("NCHW", "OIHW", "NCHW"),
            precision=lax.Precision.HIGHEST)
        x = jnp.maximum(x + b.reshape(1, -1, 1, 1), 0.0)
    return jnp.mean(x, axis=(2, 3))   # SelectAdaptivePool2d('avg') + Flatten(1)


if __name__ == "__main__":
    key = jax.random.PRNGKey(0)

    # BBlock_LowF(conv, in_channels=4, out_channels=32, kernel_size=3):
    # channels 4 -> 8 -> 16 -> 32, spatial 32 -> 16 -> 8 -> 4 -> global pool.
    # N = 8 so the kernel runs 2 grid steps of NB = 4 images each.
    N, C_IN, H, W = 8, 4, 32, 32
    C_OUT = 32
    K = 3
    chans = [C_IN, C_OUT // 4, C_OUT // 2, C_OUT]

    keys = jax.random.split(key, 1 + 2 * 3)
    x = jax.random.normal(keys[0], (N, C_IN, H, W), dtype=jnp.float32)

    params = []
    for i in range(3):
        w = jax.random.normal(keys[1 + 2 * i], (K, K, chans[i], chans[i + 1]),
                              dtype=jnp.float32) * 0.1
        b = jax.random.normal(keys[2 + 2 * i], (chans[i + 1],),
                              dtype=jnp.float32) * 0.01
        params.append((w, b))

    consts = prepare_bblock_lowf(params, H, W)   # constants built once, hoisted
    fwd = jax.jit(bblock_lowf_forward, static_argnames=("nb",))

    out = jax.block_until_ready(fwd(x, consts))

    ref = bblock_lowf_ref(x, params)
    assert out.shape == (N, C_OUT), out.shape
    err = float(jnp.max(jnp.abs(out - ref)))
    assert jnp.allclose(out, ref, atol=1e-4, rtol=1e-4), err

    print("KERNEL_OK")
</pallas_src>

<mosaic_0001>
module attributes {stable_mosaic.version = 11 : i64} {
  func.func @_bblock_lowf_kernel(%arg0: i32, %arg1: memref<4x32x128xf32, #tpu.memory_space<vmem>>, %arg2: memref<3x128x128xf32, #tpu.memory_space<vmem>>, %arg3: memref<1x128xf32, #tpu.memory_space<vmem>>, %arg4: memref<3x128x128xf32, #tpu.memory_space<vmem>>, %arg5: memref<1x128xf32, #tpu.memory_space<vmem>>, %arg6: memref<3x128x128xf32, #tpu.memory_space<vmem>>, %arg7: memref<1x128xf32, #tpu.memory_space<vmem>>, %arg8: memref<128x32xf32, #tpu.memory_space<vmem>>, %arg9: memref<1x4x32xf32, #tpu.memory_space<vmem>>, %arg10: memref<136x128xf32, #tpu.memory_space<vmem>>, %arg11: memref<72x128xf32, #tpu.memory_space<vmem>>, %arg12: memref<40x128xf32, #tpu.memory_space<vmem>>) attributes {dimension_semantics = [#tpu.dimension_semantics<parallel>], iteration_bounds = array<i64: 2>, scalar_prefetch = 0 : i64, scratch_operands = 3 : i64, tpu.core_type = #tpu.core_type<tc>, window_params = [{transform_indices = @transform_0, window_bounds = array<i64: 4, 32, 128>}, {pipeline_mode = #tpu.pipeline_mode<synchronous>, transform_indices = @transform_1, window_bounds = array<i64: 3, 128, 128>}, {pipeline_mode = #tpu.pipeline_mode<synchronous>, transform_indices = @transform_2, window_bounds = array<i64: 1, 128>}, {pipeline_mode = #tpu.pipeline_mode<synchronous>, transform_indices = @transform_3, window_bounds = array<i64: 3, 128, 128>}, {pipeline_mode = #tpu.pipeline_mode<synchronous>, transform_indices = @transform_4, window_bounds = array<i64: 1, 128>}, {pipeline_mode = #tpu.pipeline_mode<synchronous>, transform_indices = @transform_5, window_bounds = array<i64: 3, 128, 128>}, {pipeline_mode = #tpu.pipeline_mode<synchronous>, transform_indices = @transform_6, window_bounds = array<i64: 1, 128>}, {pipeline_mode = #tpu.pipeline_mode<synchronous>, transform_indices = @transform_7, window_bounds = array<i64: 128, 32>}, {transform_indices = @transform_8, window_bounds = array<i64: 1, 4, 32>}]} {
    %cst = arith.constant 0.000000e+00 : f32
    %0 = vector.broadcast %cst : f32 to vector<1x128xf32>
    %c0 = arith.constant 0 : index
    %c0_0 = arith.constant 0 : index
    %1 = vector.load %arg10[%c0, %c0_0] : memref<136x128xf32, #tpu.memory_space<vmem>>, vector<1x128xf32>
    tpu.vector_store %arg10[%c0, %c0_0], %0 {strides = array<i32>} : memref<136x128xf32, #tpu.memory_space<vmem>>, vector<1x128xf32>,
    %c33 = arith.constant 33 : index
    %c0_1 = arith.constant 0 : index
    %2 = vector.load %arg10[%c33, %c0_1] : memref<136x128xf32, #tpu.memory_space<vmem>>, vector<1x128xf32>
    tpu.vector_store %arg10[%c33, %c0_1], %0 {strides = array<i32>} : memref<136x128xf32, #tpu.memory_space<vmem>>, vector<1x128xf32>,
    %c34 = arith.constant 34 : index
    %c0_2 = arith.constant 0 : index
    %3 = vector.load %arg10[%c34, %c0_2] : memref<136x128xf32, #tpu.memory_space<vmem>>, vector<1x128xf32>
    tpu.vector_store %arg10[%c34, %c0_2], %0 {strides = array<i32>} : memref<136x128xf32, #tpu.memory_space<vmem>>, vector<1x128xf32>,
    %c67 = arith.constant 67 : index
    %c0_3 = arith.constant 0 : index
    %4 = vector.load %arg10[%c67, %c0_3] : memref<136x128xf32, #tpu.memory_space<vmem>>, vector<1x128xf32>
    tpu.vector_store %arg10[%c67, %c0_3], %0 {strides = array<i32>} : memref<136x128xf32, #tpu.memory_space<vmem>>, vector<1x128xf32>,
    %c68 = arith.constant 68 : index
    %c0_4 = arith.constant 0 : index
    %5 = vector.load %arg10[%c68, %c0_4] : memref<136x128xf32, #tpu.memory_space<vmem>>, vector<1x128xf32>
    tpu.vector_store %arg10[%c68, %c0_4], %0 {strides = array<i32>} : memref<136x128xf32, #tpu.memory_space<vmem>>, vector<1x128xf32>,
    %c101 = arith.constant 101 : index
    %c0_5 = arith.constant 0 : index
    %6 = vector.load %arg10[%c101, %c0_5] : memref<136x128xf32, #tpu.memory_space<vmem>>, vector<1x128xf32>
    tpu.vector_store %arg10[%c101, %c0_5], %0 {strides = array<i32>} : memref<136x128xf32, #tpu.memory_space<vmem>>, vector<1x128xf32>,
    %c102 = arith.constant 102 : index
    %c0_6 = arith.constant 0 : index
    %7 = vector.load %arg10[%c102, %c0_6] : memref<136x128xf32, #tpu.memory_space<vmem>>, vector<1x128xf32>
    tpu.vector_store %arg10[%c102, %c0_6], %0 {strides = array<i32>} : memref<136x128xf32, #tpu.memory_space<vmem>>, vector<1x128xf32>,
    %c135 = arith.constant 135 : index
    %c0_7 = arith.constant 0 : index
    %8 = vector.load %arg10[%c135, %c0_7] : memref<136x128xf32, #tpu.memory_space<vmem>>, vector<1x128xf32>
    tpu.vector_store %arg10[%c135, %c0_7], %0 {strides = array<i32>} : memref<136x128xf32, #tpu.memory_space<vmem>>, vector<1x128xf32>,
    %cst_8 = arith.constant 0.000000e+00 : f32
    %9 = vector.broadcast %cst_8 : f32 to vector<1x128xf32>
    %c0_9 = arith.constant 0 : index
    %c0_10 = arith.constant 0 : index
    %10 = vector.load %arg11[%c0_9, %c0_10] : memref<72x128xf32, #tpu.memory_space<vmem>>, vector<1x128xf32>
    tpu.vector_store %arg11[%c0_9, %c0_10], %9 {strides = array<i32>} : memref<72x128xf32, #tpu.memory_space<vmem>>, vector<1x128xf32>,
    %c17 = arith.constant 17 : index
    %c0_11 = arith.constant 0 : index
    %11 = vector.load %arg11[%c17, %c0_11] : memref<72x128xf32, #tpu.memory_space<vmem>>, vector<1x128xf32>
    tpu.vector_store %arg11[%c17, %c0_11], %9 {strides = array<i32>} : memref<72x128xf32, #tpu.memory_space<vmem>>, vector<1x128xf32>,
    %c18 = arith.constant 18 : index
    %c0_12 = arith.constant 0 : index
    %12 = vector.load %arg11[%c18, %c0_12] : memref<72x128xf32, #tpu.memory_space<vmem>>, vector<1x128xf32>
    tpu.vector_store %arg11[%c18, %c0_12], %9 {strides = array<i32>} : memref<72x128xf32, #tpu.memory_space<vmem>>, vector<1x128xf32>,
    %c35 = arith.constant 35 : index
    %c0_13 = arith.constant 0 : index
    %13 = vector.load %arg11[%c35, %c0_13] : memref<72x128xf32, #tpu.memory_space<vmem>>, vector<1x128xf32>
    tpu.vector_store %arg11[%c35, %c0_13], %9 {strides = array<i32>} : memref<72x128xf32, #tpu.memory_space<vmem>>, vector<1x128xf32>,
    %c36 = arith.constant 36 : index
    %c0_14 = arith.constant 0 : index
    %14 = vector.load %arg11[%c36, %c0_14] : memref<72x128xf32, #tpu.memory_space<vmem>>, vector<1x128xf32>
    tpu.vector_store %arg11[%c36, %c0_14], %9 {strides = array<i32>} : memref<72x128xf32, #tpu.memory_space<vmem>>, vector<1x128xf32>,
    %c53 = arith.constant 53 : index
    %c0_15 = arith.constant 0 : index
    %15 = vector.load %arg11[%c53, %c0_15] : memref<72x128xf32, #tpu.memory_space<vmem>>, vector<1x128xf32>
    tpu.vector_store %arg11[%c53, %c0_15], %9 {strides = array<i32>} : memref<72x128xf32, #tpu.memory_space<vmem>>, vector<1x128xf32>,
    %c54 = arith.constant 54 : index
    %c0_16 = arith.constant 0 : index
    %16 = vector.load %arg11[%c54, %c0_16] : memref<72x128xf32, #tpu.memory_space<vmem>>, vector<1x128xf32>
    tpu.vector_store %arg11[%c54, %c0_16], %9 {strides = array<i32>} : memref<72x128xf32, #tpu.memory_space<vmem>>, vector<1x128xf32>,
    %c71 = arith.constant 71 : index
    %c0_17 = arith.constant 0 : index
    %17 = vector.load %arg11[%c71, %c0_17] : memref<72x128xf32, #tpu.memory_space<vmem>>, vector<1x128xf32>
    tpu.vector_store %arg11[%c71, %c0_17], %9 {strides = array<i32>} : memref<72x128xf32, #tpu.memory_space<vmem>>, vector<1x128xf32>,
    %cst_18 = arith.constant 0.000000e+00 : f32
    %18 = vector.broadcast %cst_18 : f32 to vector<1x128xf32>
    %c0_19 = arith.constant 0 : index
    %c0_20 = arith.constant 0 : index
    %19 = vector.load %arg12[%c0_19, %c0_20] : memref<40x128xf32, #tpu.memory_space<vmem>>, vector<1x128xf32>
    tpu.vector_store %arg12[%c0_19, %c0_20], %18 {strides = array<i32>} : memref<40x128xf32, #tpu.memory_space<vmem>>, vector<1x128xf32>,
    %c9 = arith.constant 9 : index
    %c0_21 = arith.constant 0 : index
    %20 = vector.load %arg12[%c9, %c0_21] : memref<40x128xf32, #tpu.memory_space<vmem>>, vector<1x128xf32>
    tpu.vector_store %arg12[%c9, %c0_21], %18 {strides = array<i32>} : memref<40x128xf32, #tpu.memory_space<vmem>>, vector<1x128xf32>,
    %c10 = arith.constant 10 : index
    %c0_22 = arith.constant 0 : index
    %21 = vector.load %arg12[%c10, %c0_22] : memref<40x128xf32, #tpu.memory_space<vmem>>, vector<1x128xf32>
    tpu.vector_store %arg12[%c10, %c0_22], %18 {strides = array<i32>} : memref<40x128xf32, #tpu.memory_space<vmem>>, vector<1x128xf32>,
    %c19 = arith.constant 19 : index
    %c0_23 = arith.constant 0 : index
    %22 = vector.load %arg12[%c19, %c0_23] : memref<40x128xf32, #tpu.memory_space<vmem>>, vector<1x128xf32>
    tpu.vector_store %arg12[%c19, %c0_23], %18 {strides = array<i32>} : memref<40x128xf32, #tpu.memory_space<vmem>>, vector<1x128xf32>,
    %c20 = arith.constant 20 : index
    %c0_24 = arith.constant 0 : index
    %23 = vector.load %arg12[%c20, %c0_24] : memref<40x128xf32, #tpu.memory_space<vmem>>, vector<1x128xf32>
    tpu.vector_store %arg12[%c20, %c0_24], %18 {strides = array<i32>} : memref<40x128xf32, #tpu.memory_space<vmem>>, vector<1x128xf32>,
    %c29 = arith.constant 29 : index
    %c0_25 = arith.constant 0 : index
    %24 = vector.load %arg12[%c29, %c0_25] : memref<40x128xf32, #tpu.memory_space<vmem>>, vector<1x128xf32>
    tpu.vector_store %arg12[%c29, %c0_25], %18 {strides = array<i32>} : memref<40x128xf32, #tpu.memory_space<vmem>>, vector<1x128xf32>,
    %c30 = arith.constant 30 : index
    %c0_26 = arith.constant 0 : index
    %25 = vector.load %arg12[%c30, %c0_26] : memref<40x128xf32, #tpu.memory_space<vmem>>, vector<1x128xf32>
    tpu.vector_store %arg12[%c30, %c0_26], %18 {strides = array<i32>} : memref<40x128xf32, #tpu.memory_space<vmem>>, vector<1x128xf32>,
    %c39 = arith.constant 39 : index
    %c0_27 = arith.constant 0 : index
    %26 = vector.load %arg12[%c39, %c0_27] : memref<40x128xf32, #tpu.memory_space<vmem>>, vector<1x128xf32>
    tpu.vector_store %arg12[%c39, %c0_27], %18 {strides = array<i32>} : memref<40x128xf32, #tpu.memory_space<vmem>>, vector<1x128xf32>,
    %c0_28 = arith.constant 0 : index
    %c0_29 = arith.constant 0 : index
    %c0_30 = arith.constant 0 : index
    %27 = vector.load %arg1[%c0_28, %c0_29, %c0_30] : memref<4x32x128xf32, #tpu.memory_space<vmem>>, vector<1x32x128xf32>
    %28 = vector.shape_cast %27 : vector<1x32x128xf32> to vector<32x128xf32>
    %c1 = arith.constant 1 : index
    %c0_31 = arith.constant 0 : index
    %29 = vector.load %arg10[%c1, %c0_31] : memref<136x128xf32, #tpu.memory_space<vmem>>, vector<32x128xf32>
    tpu.vector_store %arg10[%c1, %c0_31], %28 {strides = array<i32>} : memref<136x128xf32, #tpu.memory_space<vmem>>, vector<32x128xf32>,
    %c1_32 = arith.constant 1 : index
    %c0_33 = arith.constant 0 : index
    %c0_34 = arith.constant 0 : index
    %30 = vector.load %arg1[%c1_32, %c0_33, %c0_34] : memref<4x32x128xf32, #tpu.memory_space<vmem>>, vector<1x32x128xf32>
    %31 = vector.shape_cast %30 : vector<1x32x128xf32> to vector<32x128xf32>
    %c35_35 = arith.constant 35 : index
    %c0_36 = arith.constant 0 : index
    %32 = vector.load %arg10[%c35_35, %c0_36] : memref<136x128xf32, #tpu.memory_space<vmem>>, vector<32x128xf32>
    tpu.vector_store %arg10[%c35_35, %c0_36], %31 {strides = array<i32>} : memref<136x128xf32, #tpu.memory_space<vmem>>, vector<32x128xf32>,
    %c2 = arith.constant 2 : index
    %c0_37 = arith.constant 0 : index
    %c0_38 = arith.constant 0 : index
    %33 = vector.load %arg1[%c2, %c0_37, %c0_38] : memref<4x32x128xf32, #tpu.memory_space<vmem>>, vector<1x32x128xf32>
    %34 = vector.shape_cast %33 : vector<1x32x128xf32> to vector<32x128xf32>
    %c69 = arith.constant 69 : index
    %c0_39 = arith.constant 0 : index
    %35 = vector.load %arg10[%c69, %c0_39] : memref<136x128xf32, #tpu.memory_space<vmem>>, vector<32x128xf32>
    tpu.vector_store %arg10[%c69, %c0_39], %34 {strides = array<i32>} : memref<136x128xf32, #tpu.memory_space<vmem>>, vector<32x128xf32>,
    %c3 = arith.constant 3 : index
    %c0_40 = arith.constant 0 : index
    %c0_41 = arith.constant 0 : index
    %36 = vector.load %arg1[%c3, %c0_40, %c0_41] : memref<4x32x128xf32, #tpu.memory_space<vmem>>, vector<1x32x128xf32>
    %37 = vector.shape_cast %36 : vector<1x32x128xf32> to vector<32x128xf32>
    %c103 = arith.constant 103 : index
    %c0_42 = arith.constant 0 : index
    %38 = vector.load %arg10[%c103, %c0_42] : memref<136x128xf32, #tpu.memory_space<vmem>>, vector<32x128xf32>
    tpu.vector_store %arg10[%c103, %c0_42], %37 {strides = array<i32>} : memref<136x128xf32, #tpu.memory_space<vmem>>, vector<32x128xf32>,
    %c0_43 = arith.constant 0 : index
    %c0_44 = arith.constant 0 : index
    %39 = tpu.strided_load %arg10[%c0_43, %c0_44] {strides = array<i32: 2, 1>} : memref<136x128xf32, #tpu.memory_space<vmem>>, vector<68x128xf32>
    %c1_45 = arith.constant 1 : index
    %c0_46 = arith.constant 0 : index
    %40 = tpu.strided_load %arg10[%c1_45, %c0_46] {strides = array<i32: 2, 1>} : memref<136x128xf32, #tpu.memory_space<vmem>>, vector<68x128xf32>
    %41 = vector.extract_strided_slice %39 {offsets = [0, 0], sizes = [67, 128], strides = [1, 1]} : vector<68x128xf32> to vector<67x128xf32>
    %c0_47 = arith.constant 0 : index
    %c0_48 = arith.constant 0 : index
    %c0_49 = arith.constant 0 : index
    %42 = vector.load %arg2[%c0_47, %c0_48, %c0_49] : memref<3x128x128xf32, #tpu.memory_space<vmem>>, vector<1x128x128xf32>
    %43 = vector.shape_cast %42 : vector<1x128x128xf32> to vector<128x128xf32>
    %cst_50 = arith.constant dense<0.000000e+00> : vector<67x128xf32>
    %44 = tpu.matmul %41, %43, %cst_50 {dimension_numbers = #tpu.dot_dimension_numbers<[1], [0], [0], [1], [0, 0, 1, 1], [], []>} : vector<67x128xf32>, vector<128x128xf32>, vector<67x128xf32> -> vector<67x128xf32>
    %45 = vector.extract_strided_slice %40 {offsets = [0, 0], sizes = [67, 128], strides = [1, 1]} : vector<68x128xf32> to vector<67x128xf32>
    %c1_51 = arith.constant 1 : index
    %c0_52 = arith.constant 0 : index
    %c0_53 = arith.constant 0 : index
    %46 = vector.load %arg2[%c1_51, %c0_52, %c0_53] : memref<3x128x128xf32, #tpu.memory_space<vmem>>, vector<1x128x128xf32>
    %47 = vector.shape_cast %46 : vector<1x128x128xf32> to vector<128x128xf32>
    %cst_54 = arith.constant dense<0.000000e+00> : vector<67x128xf32>
    %48 = tpu.matmul %45, %47, %cst_54 {dimension_numbers = #tpu.dot_dimension_numbers<[1], [0], [0], [1], [0, 0, 1, 1], [], []>} : vector<67x128xf32>, vector<128x128xf32>, vector<67x128xf32> -> vector<67x128xf32>
    %49 = arith.addf %44, %48 : vector<67x128xf32>
    %50 = vector.extract_strided_slice %39 {offsets = [1, 0], sizes = [67, 128], strides = [1, 1]} : vector<68x128xf32> to vector<67x128xf32>
    %c2_55 = arith.constant 2 : index
    %c0_56 = arith.constant 0 : index
    %c0_57 = arith.constant 0 : index
    %51 = vector.load %arg2[%c2_55, %c0_56, %c0_57] : memref<3x128x128xf32, #tpu.memory_space<vmem>>, vector<1x128x128xf32>
    %52 = vector.shape_cast %51 : vector<1x128x128xf32> to vector<128x128xf32>
    %cst_58 = arith.constant dense<0.000000e+00> : vector<67x128xf32>
    %53 = tpu.matmul %50, %52, %cst_58 {dimension_numbers = #tpu.dot_dimension_numbers<[1], [0], [0], [1], [0, 0, 1, 1], [], []>} : vector<67x128xf32>, vector<128x128xf32>, vector<67x128xf32> -> vector<67x128xf32>
    %54 = arith.addf %49, %53 : vector<67x128xf32>
    %c0_59 = arith.constant 0 : index
    %c0_60 = arith.constant 0 : index
    %55 = vector.load %arg3[%c0_59, %c0_60] : memref<1x128xf32, #tpu.memory_space<vmem>>, vector<1x128xf32>
    %56 = vector.broadcast %55 : vector<1x128xf32> to vector<67x128xf32>
    %57 = arith.addf %54, %56 : vector<67x128xf32>
    %cst_61 = arith.constant 0.000000e+00 : f32
    %58 = vector.broadcast %cst_61 : f32 to vector<67x128xf32>
    %59 = arith.maximumf %57, %58 : vector<67x128xf32>
    %60 = vector.extract_strided_slice %59 {offsets = [0, 0], sizes = [16, 128], strides = [1, 1]} : vector<67x128xf32> to vector<16x128xf32>
    %c1_62 = arith.constant 1 : index
    %c0_63 = arith.constant 0 : index
    %61 = vector.load %arg11[%c1_62, %c0_63] : memref<72x128xf32, #tpu.memory_space<vmem>>, vector<16x128xf32>
    tpu.vector_store %arg11[%c1_62, %c0_63], %60 {strides = array<i32>} : memref<72x128xf32, #tpu.memory_space<vmem>>, vector<16x128xf32>,
    %62 = vector.extract_strided_slice %59 {offsets = [17, 0], sizes = [16, 128], strides = [1, 1]} : vector<67x128xf32> to vector<16x128xf32>
    %c19_64 = arith.constant 19 : index
    %c0_65 = arith.constant 0 : index
    %63 = vector.load %arg11[%c19_64, %c0_65] : memref<72x128xf32, #tpu.memory_space<vmem>>, vector<16x128xf32>
    tpu.vector_store %arg11[%c19_64, %c0_65], %62 {strides = array<i32>} : memref<72x128xf32, #tpu.memory_space<vmem>>, vector<16x128xf32>,
    %64 = vector.extract_strided_slice %59 {offsets = [34, 0], sizes = [16, 128], strides = [1, 1]} : vector<67x128xf32> to vector<16x128xf32>
    %c37 = arith.constant 37 : index
    %c0_66 = arith.constant 0 : index
    %65 = vector.load %arg11[%c37, %c0_66] : memref<72x128xf32, #tpu.memory_space<vmem>>, vector<16x128xf32>
    tpu.vector_store %arg11[%c37, %c0_66], %64 {strides = array<i32>} : memref<72x128xf32, #tpu.memory_space<vmem>>, vector<16x128xf32>,
    %66 = vector.extract_strided_slice %59 {offsets = [51, 0], sizes = [16, 128], strides = [1, 1]} : vector<67x128xf32> to vector<16x128xf32>
    %c55 = arith.constant 55 : index
    %c0_67 = arith.constant 0 : index
    %67 = vector.load %arg11[%c55, %c0_67] : memref<72x128xf32, #tpu.memory_space<vmem>>, vector<16x128xf32>
    tpu.vector_store %arg11[%c55, %c0_67], %66 {strides = array<i32>} : memref<72x128xf32, #tpu.memory_space<vmem>>, vector<16x128xf32>,
    %c0_68 = arith.constant 0 : index
    %c0_69 = arith.constant 0 : index
    %68 = tpu.strided_load %arg11[%c0_68, %c0_69] {strides = array<i32: 2, 1>} : memref<72x128xf32, #tpu.memory_space<vmem>>, vector<36x128xf32>
    %c1_70 = arith.constant 1 : index
    %c0_71 = arith.constant 0 : index
    %69 = tpu.strided_load %arg11[%c1_70, %c0_71] {strides = array<i32: 2, 1>} : memref<72x128xf32, #tpu.memory_space<vmem>>, vector<36x128xf32>
    %70 = vector.extract_strided_slice %68 {offsets = [0, 0], sizes = [35, 128], strides = [1, 1]} : vector<36x128xf32> to vector<35x128xf32>
    %c0_72 = arith.constant 0 : index
    %c0_73 = arith.constant 0 : index
    %c0_74 = arith.constant 0 : index
    %71 = vector.load %arg4[%c0_72, %c0_73, %c0_74] : memref<3x128x128xf32, #tpu.memory_space<vmem>>, vector<1x128x128xf32>
    %72 = vector.shape_cast %71 : vector<1x128x128xf32> to vector<128x128xf32>
    %cst_75 = arith.constant dense<0.000000e+00> : vector<35x128xf32>
    %73 = tpu.matmul %70, %72, %cst_75 {dimension_numbers = #tpu.dot_dimension_numbers<[1], [0], [0], [1], [0, 0, 1, 1], [], []>} : vector<35x128xf32>, vector<128x128xf32>, vector<35x128xf32> -> vector<35x128xf32>
    %74 = vector.extract_strided_slice %69 {offsets = [0, 0], sizes = [35, 128], strides = [1, 1]} : vector<36x128xf32> to vector<35x128xf32>
    %c1_76 = arith.constant 1 : index
    %c0_77 = arith.constant 0 : index
    %c0_78 = arith.constant 0 : index
    %75 = vector.load %arg4[%c1_76, %c0_77, %c0_78] : memref<3x128x128xf32, #tpu.memory_space<vmem>>, vector<1x128x128xf32>
    %76 = vector.shape_cast %75 : vector<1x128x128xf32> to vector<128x128xf32>
    %cst_79 = arith.constant dense<0.000000e+00> : vector<35x128xf32>
    %77 = tpu.matmul %74, %76, %cst_79 {dimension_numbers = #tpu.dot_dimension_numbers<[1], [0], [0], [1], [0, 0, 1, 1], [], []>} : vector<35x128xf32>, vector<128x128xf32>, vector<35x128xf32> -> vector<35x128xf32>
    %78 = arith.addf %73, %77 : vector<35x128xf32>
    %79 = vector.extract_strided_slice %68 {offsets = [1, 0], sizes = [35, 128], strides = [1, 1]} : vector<36x128xf32> to vector<35x128xf32>
    %c2_80 = arith.constant 2 : index
    %c0_81 = arith.constant 0 : index
    %c0_82 = arith.constant 0 : index
    %80 = vector.load %arg4[%c2_80, %c0_81, %c0_82] : memref<3x128x128xf32, #tpu.memory_space<vmem>>, vector<1x128x128xf32>
    %81 = vector.shape_cast %80 : vector<1x128x128xf32> to vector<128x128xf32>
    %cst_83 = arith.constant dense<0.000000e+00> : vector<35x128xf32>
    %82 = tpu.matmul %79, %81, %cst_83 {dimension_numbers = #tpu.dot_dimension_numbers<[1], [0], [0], [1], [0, 0, 1, 1], [], []>} : vector<35x128xf32>, vector<128x128xf32>, vector<35x128xf32> -> vector<35x128xf32>
    %83 = arith.addf %78, %82 : vector<35x128xf32>
    %c0_84 = arith.constant 0 : index
    %c0_85 = arith.constant 0 : index
    %84 = vector.load %arg5[%c0_84, %c0_85] : memref<1x128xf32, #tpu.memory_space<vmem>>, vector<1x128xf32>
    %85 = vector.broadcast %84 : vector<1x128xf32> to vector<35x128xf32>
    %86 = arith.addf %83, %85 : vector<35x128xf32>
    %cst_86 = arith.constant 0.000000e+00 : f32
    %87 = vector.broadcast %cst_86 : f32 to vector<35x128xf32>
    %88 = arith.maximumf %86, %87 : vector<35x128xf32>
    %89 = vector.extract_strided_slice %88 {offsets = [0, 0], sizes = [8, 128], strides = [1, 1]} : vector<35x128xf32> to vector<8x128xf32>
    %c1_87 = arith.constant 1 : index
    %c0_88 = arith.constant 0 : index
    %90 = vector.load %arg12[%c1_87, %c0_88] : memref<40x128xf32, #tpu.memory_space<vmem>>, vector<8x128xf32>
    tpu.vector_store %arg12[%c1_87, %c0_88], %89 {strides = array<i32>} : memref<40x128xf32, #tpu.memory_space<vmem>>, vector<8x128xf32>,
    %91 = vector.extract_strided_slice %88 {offsets = [9, 0], sizes = [8, 128], strides = [1, 1]} : vector<35x128xf32> to vector<8x128xf32>
    %c11 = arith.constant 11 : index
    %c0_89 = arith.constant 0 : index
    %92 = vector.load %arg12[%c11, %c0_89] : memref<40x128xf32, #tpu.memory_space<vmem>>, vector<8x128xf32>
    tpu.vector_store %arg12[%c11, %c0_89], %91 {strides = array<i32>} : memref<40x128xf32, #tpu.memory_space<vmem>>, vector<8x128xf32>,
    %93 = vector.extract_strided_slice %88 {offsets = [18, 0], sizes = [8, 128], strides = [1, 1]} : vector<35x128xf32> to vector<8x128xf32>
    %c21 = arith.constant 21 : index
    %c0_90 = arith.constant 0 : index
    %94 = vector.load %arg12[%c21, %c0_90] : memref<40x128xf32, #tpu.memory_space<vmem>>, vector<8x128xf32>
    tpu.vector_store %arg12[%c21, %c0_90], %93 {strides = array<i32>} : memref<40x128xf32, #tpu.memory_space<vmem>>, vector<8x128xf32>,
    %95 = vector.extract_strided_slice %88 {offsets = [27, 0], sizes = [8, 128], strides = [1, 1]} : vector<35x128xf32> to vector<8x128xf32>
    %c31 = arith.constant 31 : index
    %c0_91 = arith.constant 0 : index
    %96 = vector.load %arg12[%c31, %c0_91] : memref<40x128xf32, #tpu.memory_space<vmem>>, vector<8x128xf32>
    tpu.vector_store %arg12[%c31, %c0_91], %95 {strides = array<i32>} : memref<40x128xf32, #tpu.memory_space<vmem>>, vector<8x128xf32>,
    %c0_92 = arith.constant 0 : index
    %c0_93 = arith.constant 0 : index
    %97 = tpu.strided_load %arg12[%c0_92, %c0_93] {strides = array<i32: 2, 1>} : memref<40x128xf32, #tpu.memory_space<vmem>>, vector<20x128xf32>
    %c1_94 = arith.constant 1 : index
    %c0_95 = arith.constant 0 : index
    %98 = tpu.strided_load %arg12[%c1_94, %c0_95] {strides = array<i32: 2, 1>} : memref<40x128xf32, #tpu.memory_space<vmem>>, vector<20x128xf32>
    %99 = vector.extract_strided_slice %97 {offsets = [0, 0], sizes = [19, 128], strides = [1, 1]} : vector<20x128xf32> to vector<19x128xf32>
    %c0_96 = arith.constant 0 : index
    %c0_97 = arith.constant 0 : index
    %c0_98 = arith.constant 0 : index
    %100 = vector.load %arg6[%c0_96, %c0_97, %c0_98] : memref<3x128x128xf32, #tpu.memory_space<vmem>>, vector<1x128x128xf32>
    %101 = vector.shape_cast %100 : vector<1x128x128xf32> to vector<128x128xf32>
    %cst_99 = arith.constant dense<0.000000e+00> : vector<19x128xf32>
    %102 = tpu.matmul %99, %101, %cst_99 {dimension_numbers = #tpu.dot_dimension_numbers<[1], [0], [0], [1], [0, 0, 1, 1], [], []>} : vector<19x128xf32>, vector<128x128xf32>, vector<19x128xf32> -> vector<19x128xf32>
    %103 = vector.extract_strided_slice %98 {offsets = [0, 0], sizes = [19, 128], strides = [1, 1]} : vector<20x128xf32> to vector<19x128xf32>
    %c1_100 = arith.constant 1 : index
    %c0_101 = arith.constant 0 : index
    %c0_102 = arith.constant 0 : index
    %104 = vector.load %arg6[%c1_100, %c0_101, %c0_102] : memref<3x128x128xf32, #tpu.memory_space<vmem>>, vector<1x128x128xf32>
    %105 = vector.shape_cast %104 : vector<1x128x128xf32> to vector<128x128xf32>
    %cst_103 = arith.constant dense<0.000000e+00> : vector<19x128xf32>
    %106 = tpu.matmul %103, %105, %cst_103 {dimension_numbers = #tpu.dot_dimension_numbers<[1], [0], [0], [1], [0, 0, 1, 1], [], []>} : vector<19x128xf32>, vector<128x128xf32>, vector<19x128xf32> -> vector<19x128xf32>
    %107 = arith.addf %102, %106 : vector<19x128xf32>
    %108 = vector.extract_strided_slice %97 {offsets = [1, 0], sizes = [19, 128], strides = [1, 1]} : vector<20x128xf32> to vector<19x128xf32>
    %c2_104 = arith.constant 2 : index
    %c0_105 = arith.constant 0 : index
    %c0_106 = arith.constant 0 : index
    %109 = vector.load %arg6[%c2_104, %c0_105, %c0_106] : memref<3x128x128xf32, #tpu.memory_space<vmem>>, vector<1x128x128xf32>
    %110 = vector.shape_cast %109 : vector<1x128x128xf32> to vector<128x128xf32>
    %cst_107 = arith.constant dense<0.000000e+00> : vector<19x128xf32>
    %111 = tpu.matmul %108, %110, %cst_107 {dimension_numbers = #tpu.dot_dimension_numbers<[1], [0], [0], [1], [0, 0, 1, 1], [], []>} : vector<19x128xf32>, vector<128x128xf32>, vector<19x128xf32> -> vector<19x128xf32>
    %112 = arith.addf %107, %111 : vector<19x128xf32>
    %c0_108 = arith.constant 0 : index
    %c0_109 = arith.constant 0 : index
    %113 = vector.load %arg7[%c0_108, %c0_109] : memref<1x128xf32, #tpu.memory_space<vmem>>, vector<1x128xf32>
    %114 = vector.broadcast %113 : vector<1x128xf32> to vector<19x128xf32>
    %115 = arith.addf %112, %114 : vector<19x128xf32>
    %cst_110 = arith.constant 0.000000e+00 : f32
    %116 = vector.broadcast %cst_110 : f32 to vector<19x128xf32>
    %117 = arith.maximumf %115, %116 : vector<19x128xf32>
    %118 = vector.extract_strided_slice %117 {offsets = [0, 0], sizes = [4, 128], strides = [1, 1]} : vector<19x128xf32> to vector<4x128xf32>
    %cst_111 = arith.constant dense<0.000000e+00> : vector<128xf32>
    %119 = vector.multi_reduction <add>, %118, %cst_111 [0] : vector<4x128xf32> to vector<128xf32>
    %120 = vector.shape_cast %119 : vector<128xf32> to vector<1x128xf32>
    %121 = vector.extract_strided_slice %117 {offsets = [5, 0], sizes = [4, 128], strides = [1, 1]} : vector<19x128xf32> to vector<4x128xf32>
    %cst_112 = arith.constant dense<0.000000e+00> : vector<128xf32>
    %122 = vector.multi_reduction <add>, %121, %cst_112 [0] : vector<4x128xf32> to vector<128xf32>
    %123 = vector.shape_cast %122 : vector<128xf32> to vector<1x128xf32>
    %124 = vector.extract_strided_slice %117 {offsets = [10, 0], sizes = [4, 128], strides = [1, 1]} : vector<19x128xf32> to vector<4x128xf32>
    %cst_113 = arith.constant dense<0.000000e+00> : vector<128xf32>
    %125 = vector.multi_reduction <add>, %124, %cst_113 [0] : vector<4x128xf32> to vector<128xf32>
    %126 = vector.shape_cast %125 : vector<128xf32> to vector<1x128xf32>
    %127 = vector.extract_strided_slice %117 {offsets = [15, 0], sizes = [4, 128], strides = [1, 1]} : vector<19x128xf32> to vector<4x128xf32>
    %cst_114 = arith.constant dense<0.000000e+00> : vector<128xf32>
    %128 = vector.multi_reduction <add>, %127, %cst_114 [0] : vector<4x128xf32> to vector<128xf32>
    %129 = vector.shape_cast %128 : vector<128xf32> to vector<1x128xf32>
    %130 = tpu.concatenate %120, %123, %126, %129 in 0 : vector<1x128xf32>, vector<1x128xf32>, vector<1x128xf32>, vector<1x128xf32> -> vector<4x128xf32>
    %c0_115 = arith.constant 0 : index
    %c0_116 = arith.constant 0 : index
    %131 = vector.load %arg8[%c0_115, %c0_116] : memref<128x32xf32, #tpu.memory_space<vmem>>, vector<128x32xf32>
    %cst_117 = arith.constant dense<0.000000e+00> : vector<4x32xf32>
    %132 = tpu.matmul %130, %131, %cst_117 {dimension_numbers = #tpu.dot_dimension_numbers<[1], [0], [0], [1], [0, 0, 1, 1], [], []>} : vector<4x128xf32>, vector<128x32xf32>, vector<4x32xf32> -> vector<4x32xf32>
    %c0_118 = arith.constant 0 : index
    %c0_119 = arith.constant 0 : index
    %c0_120 = arith.constant 0 : index
    %133 = vector.load %arg9[%c0_118, %c0_119, %c0_120] : memref<1x4x32xf32, #tpu.memory_space<vmem>>, vector<1x4x32xf32>
    %134 = vector.shape_cast %133 : vector<1x4x32xf32> to vector<4x32xf32>
    %135 = vector.shape_cast %132 : vector<4x32xf32> to vector<1x4x32xf32>
    tpu.vector_store %arg9[%c0_118, %c0_119, %c0_120], %135 {strides = array<i32>} : memref<1x4x32xf32, #tpu.memory_space<vmem>>, vector<1x4x32xf32>,
    return
  }
  func.func @transform_0(%arg0: i32) -> (i32, i32, i32) {
    %c0_i32 = arith.constant 0 : i32
    %c0_i32_0 = arith.constant 0 : i32
    %c0_i32_1 = arith.constant 0 : i32
    return %arg0, %c0_i32, %c0_i32_0 : i32, i32, i32
  }
  func.func @transform_1(%arg0: i32) -> (i32, i32, i32) {
    %c0_i32 = arith.constant 0 : i32
    %c0_i32_0 = arith.constant 0 : i32
    %c0_i32_1 = arith.constant 0 : i32
    %c0_i32_2 = arith.constant 0 : i32
    return %c0_i32, %c0_i32_0, %c0_i32_1 : i32, i32, i32
  }
  func.func @transform_2(%arg0: i32) -> (i32, i32) {
    %c0_i32 = arith.constant 0 : i32
    %c0_i32_0 = arith.constant 0 : i32
    %c0_i32_1 = arith.constant 0 : i32
    return %c0_i32, %c0_i32_0 : i32, i32
  }
  func.func @transform_3(%arg0: i32) -> (i32, i32, i32) {
    %c0_i32 = arith.constant 0 : i32
    %c0_i32_0 = arith.constant 0 : i32
    %c0_i32_1 = arith.constant 0 : i32
    %c0_i32_2 = arith.constant 0 : i32
    return %c0_i32, %c0_i32_0, %c0_i32_1 : i32, i32, i32
  }
  func.func @transform_4(%arg0: i32) -> (i32, i32) {
    %c0_i32 = arith.constant 0 : i32
    %c0_i32_0 = arith.constant 0 : i32
    %c0_i32_1 = arith.constant 0 : i32
    return %c0_i32, %c0_i32_0 : i32, i32
  }
  func.func @transform_5(%arg0: i32) -> (i32, i32, i32) {
    %c0_i32 = arith.constant 0 : i32
    %c0_i32_0 = arith.constant 0 : i32
    %c0_i32_1 = arith.constant 0 : i32
    %c0_i32_2 = arith.constant 0 : i32
    return %c0_i32, %c0_i32_0, %c0_i32_1 : i32, i32, i32
  }
  func.func @transform_6(%arg0: i32) -> (i32, i32) {
    %c0_i32 = arith.constant 0 : i32
    %c0_i32_0 = arith.constant 0 : i32
    %c0_i32_1 = arith.constant 0 : i32
    return %c0_i32, %c0_i32_0 : i32, i32
  }
  func.func @transform_7(%arg0: i32) -> (i32, i32) {
    %c0_i32 = arith.constant 0 : i32
    %c0_i32_0 = arith.constant 0 : i32
    %c0_i32_1 = arith.constant 0 : i32
    return %c0_i32, %c0_i32_0 : i32, i32
  }
  func.func @transform_8(%arg0: i32) -> (i32, i32, i32) {
    %c0_i32 = arith.constant 0 : i32
    %c0_i32_0 = arith.constant 0 : i32
    %c0_i32_1 = arith.constant 0 : i32
    return %arg0, %c0_i32, %c0_i32_0 : i32, i32, i32
  }
}

</mosaic_0001>

<llo_original>
// kernel: bblock_lowf_forward.1
$region0: #{bblock_lowf_forward.1}
  #allocation0 [shape = 'u32[]', space=smem, size = 0x4, offset = 0x4, fixed_abs, tag = 'smem constant byte address 0x4 - core index']
  #allocation1 [shape = 'u32[144,128]{1,0:T(1,128)}', space=vmem, size = 0x12000, scoped, tag = 'internal scratch']
  #allocation2 [shape = 'f32[136,128]{1,0:T(8,128)}', space=vmem, size = 0x11000, scoped, tag = 'scratch operand']
  #allocation3 [shape = 'f32[72,128]{1,0:T(8,128)}', space=vmem, size = 0x9000, scoped, tag = 'scratch operand']
  #allocation4 [shape = 'f32[40,128]{1,0:T(8,128)}', space=vmem, size = 0x5000, scoped, tag = 'scratch operand']
  %s0 = inlined_call_operand.vmem [shape: f32[8,32,128], index: 0, kind: input, shape index: {}]
  %s1 = inlined_call_operand.vmem [shape: f32[3,128,128], index: 1, kind: input, shape index: {}]
  %s2 = inlined_call_operand.vmem [shape: f32[1,128], index: 2, kind: input, shape index: {}]
  %s3 = inlined_call_operand.vmem [shape: f32[3,128,128], index: 3, kind: input, shape index: {}]
  %s4 = inlined_call_operand.vmem [shape: f32[1,128], index: 4, kind: input, shape index: {}]
  %s5 = inlined_call_operand.vmem [shape: f32[3,128,128], index: 5, kind: input, shape index: {}]
  %s6 = inlined_call_operand.vmem [shape: f32[1,128], index: 6, kind: input, shape index: {}]
  %s7 = inlined_call_operand.vmem [shape: f32[128,32], index: 7, kind: input, shape index: {}]
  %s8 = inlined_call_operand.hbm [shape: f32[2,4,32], index: 8, kind: output, shape index: {}]
  %s9 = sld [smem:[#allocation0]]
  $region65: #{bblock_lowf_forward.1} parent=0
    _
  %s11 = ssub.s32 1, %s9
  %s12 = scalar_select 0, %s11, %s9
  $region1: #{bblock_lowf_forward.1} parent=0
    #allocation5 [shape = 'u8[4096]{0}', space=vmem, size = 0x1000, scoped, tag = 'output window, operand 0']
    #allocation6 [shape = 's32[2]{0}', space=sflag, size = 0x8, scoped, tag = 'scoped memory for bblock_lowf_forward.1']
    %13 = vsyncpa [#allocation6], 0
    %s14 = scalar_lea.sflag [#allocation6], 1
    %15 = vsyncpa %s14, 0
    loop: start=0, step=1, limit=4
    $region2: #{bblock_lowf_forward.1} parent=1 // loop_pre_header
      _
    $region3: #{bblock_lowf_forward.1} parent=1 // loop_header
      %s17 = sphi 0, %s21
      %p18 = scmp.ge.s32.totalorder %s17, 4
      %s27 = sphi 0, %s29
      %s30 = sphi 0, %s27
      %s31 = sphi 0, %s30
      %s47 = sphi 0, %s31
      %s51 = sphi 0, %s51
      %s53 = sphi 0, %s51
      %s54 = sphi 0, %s53
      %s68 = sphi 0, %s54
      %s72 = sphi 0, %s72
      %s74 = sphi 0, %s72
      %s75 = sphi 0, %s74
      %s89 = sphi 0, %s75
      %s93 = sphi 0, %s93
      %s95 = sphi 0, %s93
      %s96 = sphi 0, %s95
      %s110 = sphi 0, %s96
      %s114 = sphi 0, %s114
      %s116 = sphi 0, %s114
      %s117 = sphi 0, %s116
      %s131 = sphi 0, %s117
      %s135 = sphi 0, %s135
      %s137 = sphi 0, %s135
      %s138 = sphi 0, %s137
      %s152 = sphi 0, %s138
      %s156 = sphi 0, %s156
      %s158 = sphi 0, %s156
      %s159 = sphi 0, %s158
      %s173 = sphi 0, %s159
      %s177 = sphi 0, %s177
      %s179 = sphi 0, %s177
      %s180 = sphi 0, %s179
      %s194 = sphi 0, %s180
      %s200 = sphi 0, %s202
      %s203 = sphi 0, %s200
      %s204 = sphi 0, %s203
      %s220 = sphi 0, %s204
    $region4: #{bblock_lowf_forward.1} parent=1 // loop_header_branch
      %20 = sbr.rel (%p18) target = $region8
    $region5: #{bblock_lowf_forward.1} parent=1 // loop_body
      %s22 = ssub.s32 %s17, 1
      %s23 = ssub.s32 %s17, 2
      %s24 = sadd.s32 %s17, 1
      %s25 = ssub.s32 %s17, %s24
      %p26 = scmp.eq.s32.totalorder %s25, 0
      %s28 = sadd.s32 %s27, 1
      %s29 = scalar_select %p26, %s27, %s28
      %p32 = pneg %p26
      %p33 = scmp.eq.s32.totalorder %s17, 1
      %p34 = por %p32, %p33
      %p35 = scmp.ne.s32.totalorder %s27, %s30
      %p36 = scmp.eq.s32.totalorder %s17, 0
      %p37 = por %p35, %p36
      %p38 = scmp.ne.s32.totalorder %s27, %s30
      %p39 = scmp.eq.s32.totalorder %s22, 1
      %p40 = por %p38, %p39
      %p41 = scmp.ne.s32.totalorder %s30, %s31
      %p42 = scmp.eq.s32.totalorder %s22, 0
      %p43 = por %p41, %p42
      %p44 = scmp.ne.s32.totalorder %s30, %s31
      %p45 = scmp.eq.s32.totalorder %s23, 1
      %p46 = por %p44, %p45
      %p48 = scmp.ne.s32.totalorder %s31, %s47
      %p49 = scmp.eq.s32.totalorder %s23, 0
      %p50 = por %p48, %p49
      %s52 = sadd.s32 %s51, 1
      %p55 = scmp.eq.s32.totalorder %s17, 1
      %p56 = scmp.ne.s32.totalorder %s51, %s53
      %p57 = scmp.eq.s32.totalorder %s17, 0
      %p58 = por %p56, %p57
      %p59 = scmp.ne.s32.totalorder %s51, %s53
      %p60 = scmp.eq.s32.totalorder %s22, 1
      %p61 = por %p59, %p60
      %p62 = scmp.ne.s32.totalorder %s53, %s54
      %p63 = scmp.eq.s32.totalorder %s22, 0
      %p64 = por %p62, %p63
      %p65 = scmp.ne.s32.totalorder %s53, %s54
      %p66 = scmp.eq.s32.totalorder %s23, 1
      %p67 = por %p65, %p66
      %p69 = scmp.ne.s32.totalorder %s54, %s68
      %p70 = scmp.eq.s32.totalorder %s23, 0
      %p71 = por %p69, %p70
      %s73 = sadd.s32 %s72, 1
      %p76 = scmp.eq.s32.totalorder %s17, 1
      %p77 = scmp.ne.s32.totalorder %s72, %s74
      %p78 = scmp.eq.s32.totalorder %s17, 0
      %p79 = por %p77, %p78
      %p80 = scmp.ne.s32.totalorder %s72, %s74
      %p81 = scmp.eq.s32.totalorder %s22, 1
      %p82 = por %p80, %p81
      %p83 = scmp.ne.s32.totalorder %s74, %s75
      %p84 = scmp.eq.s32.totalorder %s22, 0
      %p85 = por %p83, %p84
      %p86 = scmp.ne.s32.totalorder %s74, %s75
      %p87 = scmp.eq.s32.totalorder %s23, 1
      %p88 = por %p86, %p87
      %p90 = scmp.ne.s32.totalorder %s75, %s89
      %p91 = scmp.eq.s32.totalorder %s23, 0
      %p92 = por %p90, %p91
      %s94 = sadd.s32 %s93, 1
      %p97 = scmp.eq.s32.totalorder %s17, 1
      %p98 = scmp.ne.s32.totalorder %s93, %s95
      %p99 = scmp.eq.s32.totalorder %s17, 0
      %p100 = por %p98, %p99
      %p101 = scmp.ne.s32.totalorder %s93, %s95
      %p102 = scmp.eq.s32.totalorder %s22, 1
      %p103 = por %p101, %p102
      %p104 = scmp.ne.s32.totalorder %s95, %s96
      %p105 = scmp.eq.s32.totalorder %s22, 0
      %p106 = por %p104, %p105
      %p107 = scmp.ne.s32.totalorder %s95, %s96
      %p108 = scmp.eq.s32.totalorder %s23, 1
      %p109 = por %p107, %p108
      %p111 = scmp.ne.s32.totalorder %s96, %s110
      %p112 = scmp.eq.s32.totalorder %s23, 0
      %p113 = por %p111, %p112
      %s115 = sadd.s32 %s114, 1
      %p118 = scmp.eq.s32.totalorder %s17, 1
      %p119 = scmp.ne.s32.totalorder %s114, %s116
      %p120 = scmp.eq.s32.totalorder %s17, 0
      %p121 = por %p119, %p120
      %p122 = scmp.ne.s32.totalorder %s114, %s116
      %p123 = scmp.eq.s32.totalorder %s22, 1
      %p124 = por %p122, %p123
      %p125 = scmp.ne.s32.totalorder %s116, %s117
      %p126 = scmp.eq.s32.totalorder %s22, 0
      %p127 = por %p125, %p126
      %p128 = scmp.ne.s32.totalorder %s116, %s117
      %p129 = scmp.eq.s32.totalorder %s23, 1
      %p130 = por %p128, %p129
      %p132 = scmp.ne.s32.totalorder %s117, %s131
      %p133 = scmp.eq.s32.totalorder %s23, 0
      %p134 = por %p132, %p133
      %s136 = sadd.s32 %s135, 1
      %p139 = scmp.eq.s32.totalorder %s17, 1
      %p140 = scmp.ne.s32.totalorder %s135, %s137
      %p141 = scmp.eq.s32.totalorder %s17, 0
      %p142 = por %p140, %p141
      %p143 = scmp.ne.s32.totalorder %s135, %s137
      %p144 = scmp.eq.s32.totalorder %s22, 1
      %p145 = por %p143, %p144
      %p146 = scmp.ne.s32.totalorder %s137, %s138
      %p147 = scmp.eq.s32.totalorder %s22, 0
      %p148 = por %p146, %p147
      %p149 = scmp.ne.s32.totalorder %s137, %s138
      %p150 = scmp.eq.s32.totalorder %s23, 1
      %p151 = por %p149, %p150
      %p153 = scmp.ne.s32.totalorder %s138, %s152
      %p154 = scmp.eq.s32.totalorder %s23, 0
      %p155 = por %p153, %p154
      %s157 = sadd.s32 %s156, 1
      %p160 = scmp.eq.s32.totalorder %s17, 1
      %p161 = scmp.ne.s32.totalorder %s156, %s158
      %p162 = scmp.eq.s32.totalorder %s17, 0
      %p163 = por %p161, %p162
      %p164 = scmp.ne.s32.totalorder %s156, %s158
      %p165 = scmp.eq.s32.totalorder %s22, 1
      %p166 = por %p164, %p165
      %p167 = scmp.ne.s32.totalorder %s158, %s159
      %p168 = scmp.eq.s32.totalorder %s22, 0
      %p169 = por %p167, %p168
      %p170 = scmp.ne.s32.totalorder %s158, %s159
      %p171 = scmp.eq.s32.totalorder %s23, 1
      %p172 = por %p170, %p171
      %p174 = scmp.ne.s32.totalorder %s159, %s173
      %p175 = scmp.eq.s32.totalorder %s23, 0
      %p176 = por %p174, %p175
      %s178 = sadd.s32 %s177, 1
      %p181 = scmp.eq.s32.totalorder %s17, 1
      %p182 = scmp.ne.s32.totalorder %s177, %s179
      %p183 = scmp.eq.s32.totalorder %s17, 0
      %p184 = por %p182, %p183
      %p185 = scmp.ne.s32.totalorder %s177, %s179
      %p186 = scmp.eq.s32.totalorder %s22, 1
      %p187 = por %p185, %p186
      %p188 = scmp.ne.s32.totalorder %s179, %s180
      %p189 = scmp.eq.s32.totalorder %s22, 0
      %p190 = por %p188, %p189
      %p191 = scmp.ne.s32.totalorder %s179, %s180
      %p192 = scmp.eq.s32.totalorder %s23, 1
      %p193 = por %p191, %p192
      %p195 = scmp.ne.s32.totalorder %s180, %s194
      %p196 = scmp.eq.s32.totalorder %s23, 0
      %p197 = por %p195, %p196
      %s198 = ssub.s32 %s17, %s24
      %p199 = scmp.eq.s32.totalorder %s198, 0
      %s201 = sadd.s32 %s200, 1
      %s202 = scalar_select %p199, %s200, %s201
      %p205 = pneg %p199
      %p206 = scmp.eq.s32.totalorder %s17, 1
      %p207 = por %p205, %p206
      %p208 = scmp.ne.s32.totalorder %s200, %s203
      %p209 = scmp.eq.s32.totalorder %s17, 0
      %p210 = por %p208, %p209
      %p211 = scmp.ne.s32.totalorder %s200, %s203
      %p212 = scmp.eq.s32.totalorder %s22, 1
      %p213 = por %p211, %p212
      %p214 = scmp.ne.s32.totalorder %s203, %s204
      %p215 = scmp.eq.s32.totalorder %s22, 0
      %p216 = por %p214, %p215
      %p217 = scmp.ne.s32.totalorder %s203, %s204
      %p218 = scmp.eq.s32.totalorder %s23, 1
      %p219 = por %p217, %p218
      %p221 = scmp.ne.s32.totalorder %s204, %s220
      %p222 = scmp.eq.s32.totalorder %s23, 0
      %p223 = por %p221, %p222
      %p224 = scmp.le.s32.totalorder 1, %s17
      %p225 = scmp.lt.s32.totalorder %s17, 3
      %p226 = pnand %p224, %p225
      %p227 = pneg %p226
      // Predicated region
      $region9: #{bblock_lowf_forward.1} parent=5 // pred_check
        _
      $region10: #{bblock_lowf_forward.1} parent=5 // pred_check_branch
        %229 = sbr.rel (%p226) target = $region12
      $region11: #{bblock_lowf_forward.1} parent=5 // pred_region
        %s230 = ssub.s32 %s17, 1
        // Predicated region
        $region13: #{bblock_lowf_forward.1} parent=11 // pred_check
          %p231 = pneg %p64
        $region14: #{bblock_lowf_forward.1} parent=11 // pred_check_branch
          %233 = sbr.rel (%p231) target = $region16
        $region15: #{bblock_lowf_forward.1} parent=11 // pred_region
          _
        $region16: #{bblock_lowf_forward.1} parent=11 // pred_fallthru
          _
        // Predicated region
        $region17: #{bblock_lowf_forward.1} parent=11 // pred_check
          %p234 = pneg %p85
        $region18: #{bblock_lowf_forward.1} parent=11 // pred_check_branch
          %236 = sbr.rel (%p234) target = $region20
        $region19: #{bblock_lowf_forward.1} parent=11 // pred_region
          _
        $region20: #{bblock_lowf_forward.1} parent=11 // pred_fallthru
          _
        // Predicated region
        $region21: #{bblock_lowf_forward.1} parent=11 // pred_check
          %p237 = pneg %p106
        $region22: #{bblock_lowf_forward.1} parent=11 // pred_check_branch
          %239 = sbr.rel (%p237) target = $region24
        $region23: #{bblock_lowf_forward.1} parent=11 // pred_region
          _
        $region24: #{bblock_lowf_forward.1} parent=11 // pred_fallthru
          _
        // Predicated region
        $region25: #{bblock_lowf_forward.1} parent=11 // pred_check
          %p240 = pneg %p127
        $region26: #{bblock_lowf_forward.1} parent=11 // pred_check_branch
          %242 = sbr.rel (%p240) target = $region28
        $region27: #{bblock_lowf_forward.1} parent=11 // pred_region
          _
        $region28: #{bblock_lowf_forward.1} parent=11 // pred_fallthru
          _
        // Predicated region
        $region29: #{bblock_lowf_forward.1} parent=11 // pred_check
          %p243 = pneg %p148
        $region30: #{bblock_lowf_forward.1} parent=11 // pred_check_branch
          %245 = sbr.rel (%p243) target = $region32
        $region31: #{bblock_lowf_forward.1} parent=11 // pred_region
          _
        $region32: #{bblock_lowf_forward.1} parent=11 // pred_fallthru
          _
        // Predicated region
        $region33: #{bblock_lowf_forward.1} parent=11 // pred_check
          %p246 = pneg %p169
        $region34: #{bblock_lowf_forward.1} parent=11 // pred_check_branch
          %248 = sbr.rel (%p246) target = $region36
        $region35: #{bblock_lowf_forward.1} parent=11 // pred_region
          _
        $region36: #{bblock_lowf_forward.1} parent=11 // pred_fallthru
          _
        // Predicated region
        $region37: #{bblock_lowf_forward.1} parent=11 // pred_check
          %p249 = pneg %p190
        $region38: #{bblock_lowf_forward.1} parent=11 // pred_check_branch
          %251 = sbr.rel (%p249) target = $region40
        $region39: #{bblock_lowf_forward.1} parent=11 // pred_region
          _
        $region40: #{bblock_lowf_forward.1} parent=11 // pred_fallthru
          _
      $region12: #{bblock_lowf_forward.1} parent=5 // pred_fallthru
        _
      %p252 = scmp.lt.s32.totalorder %s17, 2
      // Predicated region
      $region41: #{bblock_lowf_forward.1} parent=5 // pred_check
        %p253 = pneg %p252
      $region42: #{bblock_lowf_forward.1} parent=5 // pred_check_branch
        %255 = sbr.rel (%p253) target = $region44
      $region43: #{bblock_lowf_forward.1} parent=5 // pred_region
        // Predicated region
        $region45: #{bblock_lowf_forward.1} parent=43 // pred_check
          %p256 = pneg %p37
        $region46: #{bblock_lowf_forward.1} parent=43 // pred_check_branch
          %258 = sbr.rel (%p256) target = $region48
        $region47: #{bblock_lowf_forward.1} parent=43 // pred_region
          %s259 = smul.u32 4, %s17
          %p260 = scmp.lt.s32.totalorder %s259, 7
          %s261 = scalar_select %p260, %s259, 7
          %s262 = smul.addr %s261, 4
          %s263 = smul.addr %s262, 8
          %s264 = scalar_lea.vmem %s0, %s263
          %s265 = smul.u32 4, %s17
        $region48: #{bblock_lowf_forward.1} parent=43 // pred_fallthru
          _
      $region44: #{bblock_lowf_forward.1} parent=5 // pred_fallthru
        _
      %p266 = scmp.le.s32.totalorder 1, %s17
      %p267 = scmp.lt.s32.totalorder %s17, 3
      %p268 = pnand %p266, %p267
      %p269 = pneg %p268
      // Predicated region
      $region49: #{bblock_lowf_forward.1} parent=5 // pred_check
        _
      $region50: #{bblock_lowf_forward.1} parent=5 // pred_check_branch
        %271 = sbr.rel (%p268) target = $region52
      $region51: #{bblock_lowf_forward.1} parent=5 // pred_region
        %s272 = ssub.s32 %s17, 1
        %s273 = smul.u32 4, %s22
        %p274 = scmp.lt.s32.totalorder %s273, 7
        %s275 = scalar_select %p274, %s273, 7
        %s276 = smul.addr %s275, 4
        %s277 = smul.addr %s276, 8
        %s278 = scalar_lea.vmem %s0, %s277
        %p279 = pneg %p43
        %p280 = pneg %p40
        %p281 = pneg %p64
        %p282 = pneg %p61
        %p283 = pneg %p85
        %p284 = pneg %p82
        %p285 = pneg %p106
        %p286 = pneg %p103
        %p287 = pneg %p127
        %p288 = pneg %p124
        %p289 = pneg %p148
        %p290 = pneg %p145
        %p291 = pneg %p169
        %p292 = pneg %p166
        %p293 = pneg %p190
        %p294 = pneg %p187
        %p295 = pneg %p216
        %p296 = pneg %p213
        %s297 = sand.u32 %s203, 1
        %s298 = scalar_lea.sflag [#allocation6], %s297
        %s299 = sand.u32 %s203, 1
        %s300 = smul.addr %s299, 4
        %s301 = scalar_lea.vmem [#allocation5], %s300
        %s302 = smul.u32 4, %s22
        %p303 = scmp.lt.s32.totalorder %s302, 7
        %s304 = scalar_select %p303, %s302, 7
        %s305 = smul.addr %s304, 4
        %s306 = smul.addr %s305, 8
        %s307 = scalar_lea.vmem %s0, %s306
        %s308 = smul.u32 4, %s22
        %309 = vst [vmem:[#allocation2] sm:$0x1] 0.0
        %310 = vst [vmem:[#allocation2 + $0x21] sm:$0x1] 0.0
        %311 = vst [vmem:[#allocation2 + $0x22] sm:$0x1] 0.0
        %312 = vst [vmem:[#allocation2 + $0x43] sm:$0x1] 0.0
        %313 = vst [vmem:[#allocation2 + $0x44] sm:$0x1] 0.0
        %314 = vst [vmem:[#allocation2 + $0x65] sm:$0x1] 0.0
        %315 = vst [vmem:[#allocation2 + $0x66] sm:$0x1] 0.0
        %316 = vst [vmem:[#allocation2 + $0x87] sm:$0x1] 0.0
        %317 = vst [vmem:[#allocation3] sm:$0x1] 0.0
        %318 = vst [vmem:[#allocation3 + $0x11] sm:$0x1] 0.0
        %319 = vst [vmem:[#allocation3 + $0x12] sm:$0x1] 0.0
        %320 = vst [vmem:[#allocation3 + $0x23] sm:$0x1] 0.0
        %321 = vst [vmem:[#allocation3 + $0x24] sm:$0x1] 0.0
        %322 = vst [vmem:[#allocation3 + $0x35] sm:$0x1] 0.0
        %323 = vst [vmem:[#allocation3 + $0x36] sm:$0x1] 0.0
        %324 = vst [vmem:[#allocation3 + $0x47] sm:$0x1] 0.0
        %325 = vst [vmem:[#allocation4] sm:$0x1] 0.0
        %326 = vst [vmem:[#allocation4 + $0x9] sm:$0x1] 0.0
        %327 = vst [vmem:[#allocation4 + $0xa] sm:$0x1] 0.0
        %328 = vst [vmem:[#allocation4 + $0x13] sm:$0x1] 0.0
        %329 = vst [vmem:[#allocation4 + $0x14] sm:$0x1] 0.0
        %330 = vst [vmem:[#allocation4 + $0x1d] sm:$0x1] 0.0
        %331 = vst [vmem:[#allocation4 + $0x1e] sm:$0x1] 0.0
        %332 = vst [vmem:[#allocation4 + $0x27] sm:$0x1] 0.0
        %v333 = vld [vmem:[%s307] sm:$0xff]
        %v334 = vld [vmem:[%s307 + $0x8] sm:$0xff]
        %v335 = vld [vmem:[%s307 + $0x10] sm:$0xff]
        %v336 = vld [vmem:[%s307 + $0x18] sm:$0xff]
        %337 = vst [vmem:[#allocation2 + $0x1] sm:$0xff] %v333
        %338 = vst [vmem:[#allocation2 + $0x9] sm:$0xff] %v334
        %339 = vst [vmem:[#allocation2 + $0x11] sm:$0xff] %v335
        %340 = vst [vmem:[#allocation2 + $0x19] sm:$0xff] %v336
        %s341 = scalar_lea.vmem %s307, 32
        %v342 = vld [vmem:[%s341] sm:$0xff]
        %v343 = vld [vmem:[%s341 + $0x8] sm:$0xff]
        %v344 = vld [vmem:[%s341 + $0x10] sm:$0xff]
        %v345 = vld [vmem:[%s341 + $0x18] sm:$0xff]
        %346 = vst [vmem:[#allocation2 + $0x23] sm:$0xff] %v342
        %347 = vst [vmem:[#allocation2 + $0x2b] sm:$0xff] %v343
        %348 = vst [vmem:[#allocation2 + $0x33] sm:$0xff] %v344
        %349 = vst [vmem:[#allocation2 + $0x3b] sm:$0xff] %v345
        %s350 = scalar_lea.vmem %s307, 64
        %v351 = vld [vmem:[%s350] sm:$0xff]
        %v352 = vld [vmem:[%s350 + $0x8] sm:$0xff]
        %v353 = vld [vmem:[%s350 + $0x10] sm:$0xff]
        %v354 = vld [vmem:[%s350 + $0x18] sm:$0xff]
        %355 = vst [vmem:[#allocation2 + $0x45] sm:$0xff] %v351
        %356 = vst [vmem:[#allocation2 + $0x4d] sm:$0xff] %v352
        %357 = vst [vmem:[#allocation2 + $0x55] sm:$0xff] %v353
        %358 = vst [vmem:[#allocation2 + $0x5d] sm:$0xff] %v354
        %s359 = scalar_lea.vmem %s307, 96
        %v360 = vld [vmem:[%s359] sm:$0xff]
        %v361 = vld [vmem:[%s359 + $0x8] sm:$0xff]
        %v362 = vld [vmem:[%s359 + $0x10] sm:$0xff]
        %v363 = vld [vmem:[%s359 + $0x18] sm:$0xff]
        %364 = vst [vmem:[#allocation2 + $0x67] sm:$0xff] %v360
        %365 = vst [vmem:[#allocation2 + $0x6f] sm:$0xff] %v361
        %366 = vst [vmem:[#allocation2 + $0x77] sm:$0xff] %v362
        %367 = vst [vmem:[#allocation2 + $0x7f] sm:$0xff] %v363
        %v368 = vld [vmem:[#allocation2] ss:$2 sm:$0xff]
        %s369 = scalar_lea.vmem [#allocation2], 16
        %v370 = vld [vmem:[%s369] ss:$2 sm:$0xff]
        %s371 = scalar_lea.vmem [#allocation2], 32
        %v372 = vld [vmem:[%s371] ss:$2 sm:$0xff]
        %s373 = scalar_lea.vmem [#allocation2], 48
        %v374 = vld [vmem:[%s373] ss:$2 sm:$0xff]
        %s375 = scalar_lea.vmem [#allocation2], 64
        %v376 = vld [vmem:[%s375] ss:$2 sm:$0xff]
        %s377 = scalar_lea.vmem [#allocation2], 80
        %v378 = vld [vmem:[%s377] ss:$2 sm:$0xff]
        %s379 = scalar_lea.vmem [#allocation2], 96
        %v380 = vld [vmem:[%s379] ss:$2 sm:$0xff]
        %s381 = scalar_lea.vmem [#allocation2], 112
        %v382 = vld [vmem:[%s381] ss:$2 sm:$0xff]
        %s383 = scalar_lea.vmem [#allocation2], 128
        %v384 = vld [vmem:[%s383] ss:$2 sm:$0xf]
        %s385 = scalar_lea.vmem [#allocation2], 1
        %v386 = vld [vmem:[%s385] ss:$2 sm:$0xff]
        %s387 = scalar_lea.vmem [#allocation2], 17
        %v388 = vld [vmem:[%s387] ss:$2 sm:$0xff]
        %s389 = scalar_lea.vmem [#allocation2], 33
        %v390 = vld [vmem:[%s389] ss:$2 sm:$0xff]
        %s391 = scalar_lea.vmem [#allocation2], 49
        %v392 = vld [vmem:[%s391] ss:$2 sm:$0xff]
        %s393 = scalar_lea.vmem [#allocation2], 65
        %v394 = vld [vmem:[%s393] ss:$2 sm:$0xff]
        %s395 = scalar_lea.vmem [#allocation2], 81
        %v396 = vld [vmem:[%s395] ss:$2 sm:$0xff]
        %s397 = scalar_lea.vmem [#allocation2], 97
        %v398 = vld [vmem:[%s397] ss:$2 sm:$0xff]
        %s399 = scalar_lea.vmem [#allocation2], 113
        %v400 = vld [vmem:[%s399] ss:$2 sm:$0xff]
        %s401 = scalar_lea.vmem [#allocation2], 129
        %v402 = vld [vmem:[%s401] ss:$2 sm:$0xf]
        %v403 = vld [vmem:[%s1] sm:$0xff]
        %v404 = vld [vmem:[%s1 + $0x8] sm:$0xff]
        %v405 = vld [vmem:[%s1 + $0x10] sm:$0xff]
        %v406 = vld [vmem:[%s1 + $0x18] sm:$0xff]
        %v407 = vld [vmem:[%s1 + $0x20] sm:$0xff]
        %v408 = vld [vmem:[%s1 + $0x28] sm:$0xff]
        %v409 = vld [vmem:[%s1 + $0x30] sm:$0xff]
        %v410 = vld [vmem:[%s1 + $0x38] sm:$0xff]
        %v411 = vld [vmem:[%s1 + $0x40] sm:$0xff]
        %v412 = vld [vmem:[%s1 + $0x48] sm:$0xff]
        %v413 = vld [vmem:[%s1 + $0x50] sm:$0xff]
        %v414 = vld [vmem:[%s1 + $0x58] sm:$0xff]
        %v415 = vld [vmem:[%s1 + $0x60] sm:$0xff]
        %v416 = vld [vmem:[%s1 + $0x68] sm:$0xff]
        %v417 = vld [vmem:[%s1 + $0x70] sm:$0xff]
        %v418 = vld [vmem:[%s1 + $0x78] sm:$0xff]
        %s419 = scalar_lea.vmem %s1, 128
        %v420 = vld [vmem:[%s419] sm:$0xff]
        %v421 = vld [vmem:[%s419 + $0x8] sm:$0xff]
        %v422 = vld [vmem:[%s419 + $0x10] sm:$0xff]
        %v423 = vld [vmem:[%s419 + $0x18] sm:$0xff]
        %v424 = vld [vmem:[%s419 + $0x20] sm:$0xff]
        %v425 = vld [vmem:[%s419 + $0x28] sm:$0xff]
        %v426 = vld [vmem:[%s419 + $0x30] sm:$0xff]
        %v427 = vld [vmem:[%s419 + $0x38] sm:$0xff]
        %v428 = vld [vmem:[%s419 + $0x40] sm:$0xff]
        %v429 = vld [vmem:[%s419 + $0x48] sm:$0xff]
        %v430 = vld [vmem:[%s419 + $0x50] sm:$0xff]
        %v431 = vld [vmem:[%s419 + $0x58] sm:$0xff]
        %v432 = vld [vmem:[%s419 + $0x60] sm:$0xff]
        %v433 = vld [vmem:[%s419 + $0x68] sm:$0xff]
        %v434 = vld [vmem:[%s419 + $0x70] sm:$0xff]
        %v435 = vld [vmem:[%s419 + $0x78] sm:$0xff]
        %436 = vmatprep.subr.mxu0 0.0
        %437 = vmatpush1.msra.mxu0 %v420
        %438 = vmatprep.subr.mxu0 0.0
        %439 = vmatpush1.msra.mxu0 %v421
        %440 = vmatprep.subr.mxu0 0.0
        %441 = vmatpush1.msra.mxu0 %v422
        %442 = vmatprep.subr.mxu0 0.0
        %443 = vmatpush1.msra.mxu0 %v423
        %444 = vmatprep.subr.mxu0 0.0
        %445 = vmatpush1.msra.mxu0 %v424
        %446 = vmatprep.subr.mxu0 0.0
        %447 = vmatpush1.msra.mxu0 %v425
        %448 = vmatprep.subr.mxu0 0.0
        %449 = vmatpush1.msra.mxu0 %v426
        %450 = vmatprep.subr.mxu0 0.0
        %451 = vmatpush1.msra.mxu0 %v427
        %452 = vmatprep.subr.mxu0 0.0
        %453 = vmatpush1.msra.mxu0 %v428
        %454 = vmatprep.subr.mxu0 0.0
        %455 = vmatpush1.msra.mxu0 %v429
        %456 = vmatprep.subr.mxu0 0.0
        %457 = vmatpush1.msra.mxu0 %v430
        %458 = vmatprep.subr.mxu0 0.0
        %459 = vmatpush1.msra.mxu0 %v431
        %460 = vmatprep.subr.mxu0 0.0
        %461 = vmatpush1.msra.mxu0 %v432
        %462 = vmatprep.subr.mxu0 0.0
        %463 = vmatpush1.msra.mxu0 %v433
        %464 = vmatprep.subr.mxu0 0.0
        %465 = vmatpush1.msra.mxu0 %v434
        %466 = vmatprep.subr.mxu0 0.0
        %467 = vmatpush1.msra.mxu0 %v435
        %468 = vmatprep.subr.mxu0 0.0
        %469 = vmatpush1.msra.mxu0 0.0
        %470 = vmatprep.subr.mxu0 0.0
        %471 = vmatpush1.msra.mxu0 0.0
        %472 = vmatprep.subr.mxu0 0.0
        %473 = vmatpush1.msra.mxu0 0.0
        %474 = vmatprep.subr.mxu0 0.0
        %475 = vmatpush1.msra.mxu0 0.0
        %476 = vmatprep.subr.mxu0 0.0
        %477 = vmatpush1.msra.mxu0 0.0
        %478 = vmatprep.subr.mxu0 0.0
        %479 = vmatpush1.msra.mxu0 0.0
        %480 = vmatprep.subr.mxu0 0.0
        %481 = vmatpush1.msra.mxu0 0.0
        %482 = vmatprep.subr.mxu0 0.0
        %483 = vmatpush1.msra.mxu0 0.0
        %484 = vmatprep.subr.mxu0 0.0
        %485 = vmatpush1.msra.mxu0 0.0
        %486 = vmatprep.subr.mxu0 0.0
        %487 = vmatpush1.msra.mxu0 0.0
        %488 = vmatprep.subr.mxu0 0.0
        %489 = vmatpush1.msra.mxu0 0.0
        %490 = vmatprep.subr.mxu0 0.0
        %491 = vmatpush1.msra.mxu0 0.0
        %492 = vmatprep.subr.mxu0 0.0
        %493 = vmatpush1.msra.mxu0 0.0
        %494 = vmatprep.subr.mxu0 0.0
        %495 = vmatpush1.msra.mxu0 0.0
        %496 = vmatprep.subr.mxu0 0.0
        %497 = vmatpush1.msra.mxu0 0.0
        %498 = vmatprep.subr.mxu0 0.0
        %499 = vmatpush1.msra.mxu0 0.0
        %500 = vmatprep.mubr.f32.mxu0 0.0
        %501 = vmatmul.mubr.f32.gmra.mrb[0].mxu0 %v386
        %v502 = vpop.f32.mrb[0].mxu0
        %v503 = vadd.f32 0.0, %v502
        %v504 = vpop.f32.mrb[0].mxu0
        %505 = vmatprep.mubr.f32.mxu0 0.0
        %506 = vmatmul.mubr.f32.gmra.mrb[0].mxu0 %v388
        %v507 = vpop.f32.mrb[0].mxu0
        %v508 = vadd.f32 0.0, %v507
        %v509 = vpop.f32.mrb[0].mxu0
        %510 = vmatprep.mubr.f32.mxu0 0.0
        %511 = vmatmul.mubr.f32.gmra.mrb[0].mxu0 %v390
        %v512 = vpop.f32.mrb[0].mxu0
        %v513 = vadd.f32 0.0, %v512
        %v514 = vpop.f32.mrb[0].mxu0
        %515 = vmatprep.mubr.f32.mxu0 0.0
        %516 = vmatmul.mubr.f32.gmra.mrb[0].mxu0 %v392
        %v517 = vpop.f32.mrb[0].mxu0
        %v518 = vadd.f32 0.0, %v517
        %v519 = vpop.f32.mrb[0].mxu0
        %520 = vmatprep.mubr.f32.mxu0 0.0
        %521 = vmatmul.mubr.f32.gmra.mrb[0].mxu0 %v394
        %v522 = vpop.f32.mrb[0].mxu0
        %v523 = vadd.f32 0.0, %v522
        %v524 = vpop.f32.mrb[0].mxu0
        %525 = vmatprep.mubr.f32.mxu0 0.0
        %526 = vmatmul.mubr.f32.gmra.mrb[0].mxu0 %v396
        %v527 = vpop.f32.mrb[0].mxu0
        %v528 = vadd.f32 0.0, %v527
        %v529 = vpop.f32.mrb[0].mxu0
        %530 = vmatprep.mubr.f32.mxu0 0.0
        %531 = vmatmul.mubr.f32.gmra.mrb[0].mxu0 %v398
        %v532 = vpop.f32.mrb[0].mxu0
        %v533 = vadd.f32 0.0, %v532
        %v534 = vpop.f32.mrb[0].mxu0
        %535 = vmatprep.mubr.f32.mxu0 0.0
        %536 = vmatmul.mubr.f32.gmra.mrb[0].mxu0 %v400
        %v537 = vpop.f32.mrb[0].mxu0
        %v538 = vadd.f32 0.0, %v537
        %v539 = vpop.f32.mrb[0].mxu0
        %540 = vmatprep.mubr.f32.mxu0 0.0
        %541 = vmatmul.mubr.f32.gmra.mrb[0].mxu0 %v402
        %v542 = vpop.f32.mrb[0].mxu0
        %v543 = vadd.f32 0.0, %v542
        %v544 = vpop.f32.mrb[0].mxu0
        %545 = vdwg.mxu0
        %546 = vmatprep.subr.mxu0 0.0
        %547 = vmatpush1.msra.mxu0 %v403
        %548 = vmatprep.subr.mxu0 0.0
        %549 = vmatpush1.msra.mxu0 %v404
        %550 = vmatprep.subr.mxu0 0.0
        %551 = vmatpush1.msra.mxu0 %v405
        %552 = vmatprep.subr.mxu0 0.0
        %553 = vmatpush1.msra.mxu0 %v406
        %554 = vmatprep.subr.mxu0 0.0
        %555 = vmatpush1.msra.mxu0 %v407
        %556 = vmatprep.subr.mxu0 0.0
        %557 = vmatpush1.msra.mxu0 %v408
        %558 = vmatprep.subr.mxu0 0.0
        %559 = vmatpush1.msra.mxu0 %v409
        %560 = vmatprep.subr.mxu0 0.0
        %561 = vmatpush1.msra.mxu0 %v410
        %562 = vmatprep.subr.mxu0 0.0
        %563 = vmatpush1.msra.mxu0 %v411
        %564 = vmatprep.subr.mxu0 0.0
        %565 = vmatpush1.msra.mxu0 %v412
        %566 = vmatprep.subr.mxu0 0.0
        %567 = vmatpush1.msra.mxu0 %v413
        %568 = vmatprep.subr.mxu0 0.0
        %569 = vmatpush1.msra.mxu0 %v414
        %570 = vmatprep.subr.mxu0 0.0
        %571 = vmatpush1.msra.mxu0 %v415
        %572 = vmatprep.subr.mxu0 0.0
        %573 = vmatpush1.msra.mxu0 %v416
        %574 = vmatprep.subr.mxu0 0.0
        %575 = vmatpush1.msra.mxu0 %v417
        %576 = vmatprep.subr.mxu0 0.0
        %577 = vmatpush1.msra.mxu0 %v418
        %578 = vmatprep.subr.mxu0 0.0
        %579 = vmatpush1.msra.mxu0 0.0
        %580 = vmatprep.subr.mxu0 0.0
        %581 = vmatpush1.msra.mxu0 0.0
        %582 = vmatprep.subr.mxu0 0.0
        %583 = vmatpush1.msra.mxu0 0.0
        %584 = vmatprep.subr.mxu0 0.0
        %585 = vmatpush1.msra.mxu0 0.0
        %586 = vmatprep.subr.mxu0 0.0
        %587 = vmatpush1.msra.mxu0 0.0
        %588 = vmatprep.subr.mxu0 0.0
        %589 = vmatpush1.msra.mxu0 0.0
        %590 = vmatprep.subr.mxu0 0.0
        %591 = vmatpush1.msra.mxu0 0.0
        %592 = vmatprep.subr.mxu0 0.0
        %593 = vmatpush1.msra.mxu0 0.0
        %594 = vmatprep.subr.mxu0 0.0
        %595 = vmatpush1.msra.mxu0 0.0
        %596 = vmatprep.subr.mxu0 0.0
        %597 = vmatpush1.msra.mxu0 0.0
        %598 = vmatprep.subr.mxu0 0.0
        %599 = vmatpush1.msra.mxu0 0.0
        %600 = vmatprep.subr.mxu0 0.0
        %601 = vmatpush1.msra.mxu0 0.0
        %602 = vmatprep.subr.mxu0 0.0
        %603 = vmatpush1.msra.mxu0 0.0
        %604 = vmatprep.subr.mxu0 0.0
        %605 = vmatpush1.msra.mxu0 0.0
        %606 = vmatprep.subr.mxu0 0.0
        %607 = vmatpush1.msra.mxu0 0.0
        %608 = vmatprep.subr.mxu0 0.0
        %609 = vmatpush1.msra.mxu0 0.0
        %610 = vmatprep.mubr.f32.mxu0 0.0
        %611 = vmatmul.mubr.f32.gmra.mrb[0].mxu0 %v368
        %v612 = vpop.f32.mrb[0].mxu0
        %v613 = vadd.f32 %v503, %v612
        %v614 = vpop.f32.mrb[0].mxu0
        %615 = vmatprep.mubr.f32.mxu0 0.0
        %616 = vmatmul.mubr.f32.gmra.mrb[0].mxu0 %v370
        %v617 = vpop.f32.mrb[0].mxu0
        %v618 = vadd.f32 %v508, %v617
        %v619 = vpop.f32.mrb[0].mxu0
        %620 = vmatprep.mubr.f32.mxu0 0.0
        %621 = vmatmul.mubr.f32.gmra.mrb[0].mxu0 %v372
        %v622 = vpop.f32.mrb[0].mxu0
        %v623 = vadd.f32 %v513, %v622
        %v624 = vpop.f32.mrb[0].mxu0
        %625 = vmatprep.mubr.f32.mxu0 0.0
        %626 = vmatmul.mubr.f32.gmra.mrb[0].mxu0 %v374
        %v627 = vpop.f32.mrb[0].mxu0
        %v628 = vadd.f32 %v518, %v627
        %v629 = vpop.f32.mrb[0].mxu0
        %630 = vmatprep.mubr.f32.mxu0 0.0
        %631 = vmatmul.mubr.f32.gmra.mrb[0].mxu0 %v376
        %v632 = vpop.f32.mrb[0].mxu0
        %v633 = vadd.f32 %v523, %v632
        %v634 = vpop.f32.mrb[0].mxu0
        %635 = vmatprep.mubr.f32.mxu0 0.0
        %636 = vmatmul.mubr.f32.gmra.mrb[0].mxu0 %v378
        %v637 = vpop.f32.mrb[0].mxu0
        %v638 = vadd.f32 %v528, %v637
        %v639 = vpop.f32.mrb[0].mxu0
        %640 = vmatprep.mubr.f32.mxu0 0.0
        %641 = vmatmul.mubr.f32.gmra.mrb[0].mxu0 %v380
        %v642 = vpop.f32.mrb[0].mxu0
        %v643 = vadd.f32 %v533, %v642
        %v644 = vpop.f32.mrb[0].mxu0
        %645 = vmatprep.mubr.f32.mxu0 0.0
        %646 = vmatmul.mubr.f32.gmra.mrb[0].mxu0 %v382
        %v647 = vpop.f32.mrb[0].mxu0
        %v648 = vadd.f32 %v538, %v647
        %v649 = vpop.f32.mrb[0].mxu0
        %650 = vmatprep.mubr.f32.mxu0 0.0
        %651 = vmatmul.mubr.f32.gmra.mrb[0].mxu0 %v384
        %v652 = vpop.f32.mrb[0].mxu0
        %v653 = vadd.f32 %v543, %v652
        %v654 = vpop.f32.mrb[0].mxu0
        %655 = vdwg.mxu0
        %s656 = scalar_lea.vmem %s1, 256
        %v657 = vld [vmem:[%s656] sm:$0xff]
        %v658 = vld [vmem:[%s656 + $0x8] sm:$0xff]
        %v659 = vld [vmem:[%s656 + $0x10] sm:$0xff]
        %v660 = vld [vmem:[%s656 + $0x18] sm:$0xff]
        %v661 = vld [vmem:[%s656 + $0x20] sm:$0xff]
        %v662 = vld [vmem:[%s656 + $0x28] sm:$0xff]
        %v663 = vld [vmem:[%s656 + $0x30] sm:$0xff]
        %v664 = vld [vmem:[%s656 + $0x38] sm:$0xff]
        %v665 = vld [vmem:[%s656 + $0x40] sm:$0xff]
        %v666 = vld [vmem:[%s656 + $0x48] sm:$0xff]
        %v667 = vld [vmem:[%s656 + $0x50] sm:$0xff]
        %v668 = vld [vmem:[%s656 + $0x58] sm:$0xff]
        %v669 = vld [vmem:[%s656 + $0x60] sm:$0xff]
        %v670 = vld [vmem:[%s656 + $0x68] sm:$0xff]
        %v671 = vld [vmem:[%s656 + $0x70] sm:$0xff]
        %v672 = vld [vmem:[%s656 + $0x78] sm:$0xff]
        %vm682 = vcmask 1046528
        %v683 = vrot.slane %v368, 1
        %v684 = vrot.slane %v370, 1
        %v685 = vsel %vm682, %v683, %v684
        %v686 = vrot.slane %v372, 1
        %v687 = vsel %vm682, %v684, %v686
        %v688 = vrot.slane %v374, 1
        %v689 = vsel %vm682, %v686, %v688
        %v690 = vrot.slane %v376, 1
        %v691 = vsel %vm682, %v688, %v690
        %v692 = vrot.slane %v378, 1
        %v693 = vsel %vm682, %v690, %v692
        %v694 = vrot.slane %v380, 1
        %v695 = vsel %vm682, %v692, %v694
        %v696 = vrot.slane %v382, 1
        %v697 = vsel %vm682, %v694, %v696
        %v698 = vrot.slane %v384, 1
        %v699 = vsel %vm682, %v696, %v698
        %709 = vmatprep.subr.mxu0 0.0
        %710 = vmatpush1.msra.mxu0 %v657
        %711 = vmatprep.subr.mxu0 0.0
        %712 = vmatpush1.msra.mxu0 %v658
        %713 = vmatprep.subr.mxu0 0.0
        %714 = vmatpush1.msra.mxu0 %v659
        %715 = vmatprep.subr.mxu0 0.0
        %716 = vmatpush1.msra.mxu0 %v660
        %717 = vmatprep.subr.mxu0 0.0
        %718 = vmatpush1.msra.mxu0 %v661
        %719 = vmatprep.subr.mxu0 0.0
        %720 = vmatpush1.msra.mxu0 %v662
        %721 = vmatprep.subr.mxu0 0.0
        %722 = vmatpush1.msra.mxu0 %v663
        %723 = vmatprep.subr.mxu0 0.0
        %724 = vmatpush1.msra.mxu0 %v664
        %725 = vmatprep.subr.mxu0 0.0
        %726 = vmatpush1.msra.mxu0 %v665
        %727 = vmatprep.subr.mxu0 0.0
        %728 = vmatpush1.msra.mxu0 %v666
        %729 = vmatprep.subr.mxu0 0.0
        %730 = vmatpush1.msra.mxu0 %v667
        %731 = vmatprep.subr.mxu0 0.0
        %732 = vmatpush1.msra.mxu0 %v668
        %733 = vmatprep.subr.mxu0 0.0
        %734 = vmatpush1.msra.mxu0 %v669
        %735 = vmatprep.subr.mxu0 0.0
        %736 = vmatpush1.msra.mxu0 %v670
        %737 = vmatprep.subr.mxu0 0.0
        %738 = vmatpush1.msra.mxu0 %v671
        %739 = vmatprep.subr.mxu0 0.0
        %740 = vmatpush1.msra.mxu0 %v672
        %741 = vmatprep.subr.mxu0 0.0
        %742 = vmatpush1.msra.mxu0 0.0
        %743 = vmatprep.subr.mxu0 0.0
        %744 = vmatpush1.msra.mxu0 0.0
        %745 = vmatprep.subr.mxu0 0.0
        %746 = vmatpush1.msra.mxu0 0.0
        %747 = vmatprep.subr.mxu0 0.0
        %748 = vmatpush1.msra.mxu0 0.0
        %749 = vmatprep.subr.mxu0 0.0
        %750 = vmatpush1.msra.mxu0 0.0
        %751 = vmatprep.subr.mxu0 0.0
        %752 = vmatpush1.msra.mxu0 0.0
        %753 = vmatprep.subr.mxu0 0.0
        %754 = vmatpush1.msra.mxu0 0.0
        %755 = vmatprep.subr.mxu0 0.0
        %756 = vmatpush1.msra.mxu0 0.0
        %757 = vmatprep.subr.mxu0 0.0
        %758 = vmatpush1.msra.mxu0 0.0
        %759 = vmatprep.subr.mxu0 0.0
        %760 = vmatpush1.msra.mxu0 0.0
        %761 = vmatprep.subr.mxu0 0.0
        %762 = vmatpush1.msra.mxu0 0.0
        %763 = vmatprep.subr.mxu0 0.0
        %764 = vmatpush1.msra.mxu0 0.0
        %765 = vmatprep.subr.mxu0 0.0
        %766 = vmatpush1.msra.mxu0 0.0
        %767 = vmatprep.subr.mxu0 0.0
        %768 = vmatpush1.msra.mxu0 0.0
        %769 = vmatprep.subr.mxu0 0.0
        %770 = vmatpush1.msra.mxu0 0.0
        %771 = vmatprep.subr.mxu0 0.0
        %772 = vmatpush1.msra.mxu0 0.0
        %773 = vmatprep.mubr.f32.mxu0 0.0
        %774 = vmatmul.mubr.f32.gmra.mrb[0].mxu0 %v685
        %v775 = vpop.f32.mrb[0].mxu0
        %v776 = vadd.f32 0.0, %v775
        %v777 = vpop.f32.mrb[0].mxu0
        %778 = vmatprep.mubr.f32.mxu0 0.0
        %779 = vmatmul.mubr.f32.gmra.mrb[0].mxu0 %v687
        %v780 = vpop.f32.mrb[0].mxu0
        %v781 = vadd.f32 0.0, %v780
        %v782 = vpop.f32.mrb[0].mxu0
        %783 = vmatprep.mubr.f32.mxu0 0.0
        %784 = vmatmul.mubr.f32.gmra.mrb[0].mxu0 %v689
        %v785 = vpop.f32.mrb[0].mxu0
        %v786 = vadd.f32 0.0, %v785
        %v787 = vpop.f32.mrb[0].mxu0
        %788 = vmatprep.mubr.f32.mxu0 0.0
        %789 = vmatmul.mubr.f32.gmra.mrb[0].mxu0 %v691
        %v790 = vpop.f32.mrb[0].mxu0
        %v791 = vadd.f32 0.0, %v790
        %v792 = vpop.f32.mrb[0].mxu0
        %793 = vmatprep.mubr.f32.mxu0 0.0
        %794 = vmatmul.mubr.f32.gmra.mrb[0].mxu0 %v693
        %v795 = vpop.f32.mrb[0].mxu0
        %v796 = vadd.f32 0.0, %v795
        %v797 = vpop.f32.mrb[0].mxu0
        %798 = vmatprep.mubr.f32.mxu0 0.0
        %799 = vmatmul.mubr.f32.gmra.mrb[0].mxu0 %v695
        %v800 = vpop.f32.mrb[0].mxu0
        %v801 = vadd.f32 0.0, %v800
        %v802 = vpop.f32.mrb[0].mxu0
        %803 = vmatprep.mubr.f32.mxu0 0.0
        %804 = vmatmul.mubr.f32.gmra.mrb[0].mxu0 %v697
        %v805 = vpop.f32.mrb[0].mxu0
        %v806 = vadd.f32 0.0, %v805
        %v807 = vpop.f32.mrb[0].mxu0
        %808 = vmatprep.mubr.f32.mxu0 0.0
        %809 = vmatmul.mubr.f32.gmra.mrb[0].mxu0 %v699
        %v810 = vpop.f32.mrb[0].mxu0
        %v811 = vadd.f32 0.0, %v810
        %v812 = vpop.f32.mrb[0].mxu0
        %813 = vmatprep.mubr.f32.mxu0 0.0
        %814 = vmatmul.mubr.f32.gmra.mrb[0].mxu0 %v698
        %v815 = vpop.f32.mrb[0].mxu0
        %v816 = vadd.f32 0.0, %v815
        %v817 = vpop.f32.mrb[0].mxu0
        %818 = vdwg.mxu0
        %v819 = vadd.f32 %v613, %v776
        %v820 = vadd.f32 %v618, %v781
        %v821 = vadd.f32 %v623, %v786
        %v822 = vadd.f32 %v628, %v791
        %v823 = vadd.f32 %v633, %v796
        %v824 = vadd.f32 %v638, %v801
        %v825 = vadd.f32 %v643, %v806
        %v826 = vadd.f32 %v648, %v811
        %v827 = vadd.f32 %v653, %v816
        %v828 = vld [vmem:[%s2] sm:$0x1]
        %v830 = vlaneseq
        %v831 = vshrl.u32 %v830, 7
        %v832 = vsub.s32 0, %v831
        %v833 = vrot.slane %v828, %v832
        %v835 = vadd.f32 %v819, %v833
        %v836 = vadd.f32 %v820, %v833
        %v837 = vadd.f32 %v821, %v833
        %v838 = vadd.f32 %v822, %v833
        %v839 = vadd.f32 %v823, %v833
        %v840 = vadd.f32 %v824, %v833
        %v841 = vadd.f32 %v825, %v833
        %v842 = vadd.f32 %v826, %v833
        %v843 = vadd.f32 %v827, %v833
        %v844 = vmax.f32 %v835, 0.0
        %v845 = vmax.f32 %v836, 0.0
        %v846 = vmax.f32 %v837, 0.0
        %v847 = vmax.f32 %v838, 0.0
        %v848 = vmax.f32 %v839, 0.0
        %v849 = vmax.f32 %v840, 0.0
        %v850 = vmax.f32 %v841, 0.0
        %v851 = vmax.f32 %v842, 0.0
        %v852 = vmax.f32 %v843, 0.0
        %853 = vst [vmem:[#allocation3 + $0x1] sm:$0xff] %v844
        %854 = vst [vmem:[#allocation3 + $0x9] sm:$0xff] %v845
        %855 = vst [vmem:[#allocation3 + $0x12] sm:$0xfe] %v846
        %856 = vst [vmem:[#allocation3 + $0x1a] sm:$0xff] %v847
        %857 = vst [vmem:[#allocation3 + $0x22] sm:$0x1] %v848
        %858 = vst [vmem:[#allocation3 + $0x23] sm:$0xfc] %v848
        %859 = vst [vmem:[#allocation3 + $0x2b] sm:$0xff] %v849
        %860 = vst [vmem:[#allocation3 + $0x33] sm:$0x3] %v850
        %861 = vst [vmem:[#allocation3 + $0x34] sm:$0xf8] %v850
        %862 = vst [vmem:[#allocation3 + $0x3c] sm:$0xff] %v851
        %863 = vst [vmem:[#allocation3 + $0x44] sm:$0x7] %v852
        %v864 = vld [vmem:[#allocation3] ss:$2 sm:$0xff]
        %s865 = scalar_lea.vmem [#allocation3], 16
        %v866 = vld [vmem:[%s865] ss:$2 sm:$0xff]
        %s867 = scalar_lea.vmem [#allocation3], 32
        %v868 = vld [vmem:[%s867] ss:$2 sm:$0xff]
        %s869 = scalar_lea.vmem [#allocation3], 48
        %v870 = vld [vmem:[%s869] ss:$2 sm:$0xff]
        %s871 = scalar_lea.vmem [#allocation3], 64
        %v872 = vld [vmem:[%s871] ss:$2 sm:$0xf]
        %s873 = scalar_lea.vmem [#allocation3], 1
        %v874 = vld [vmem:[%s873] ss:$2 sm:$0xff]
        %s875 = scalar_lea.vmem [#allocation3], 17
        %v876 = vld [vmem:[%s875] ss:$2 sm:$0xff]
        %s877 = scalar_lea.vmem [#allocation3], 33
        %v878 = vld [vmem:[%s877] ss:$2 sm:$0xff]
        %s879 = scalar_lea.vmem [#allocation3], 49
        %v880 = vld [vmem:[%s879] ss:$2 sm:$0xff]
        %s881 = scalar_lea.vmem [#allocation3], 65
        %v882 = vld [vmem:[%s881] ss:$2 sm:$0xf]
        %v883 = vld [vmem:[%s3] sm:$0xff]
        %v884 = vld [vmem:[%s3 + $0x8] sm:$0xff]
        %v885 = vld [vmem:[%s3 + $0x10] sm:$0xff]
        %v886 = vld [vmem:[%s3 + $0x18] sm:$0xff]
        %v887 = vld [vmem:[%s3 + $0x20] sm:$0xff]
        %v888 = vld [vmem:[%s3 + $0x28] sm:$0xff]
        %v889 = vld [vmem:[%s3 + $0x30] sm:$0xff]
        %v890 = vld [vmem:[%s3 + $0x38] sm:$0xff]
        %v891 = vld [vmem:[%s3 + $0x40] sm:$0xff]
        %v892 = vld [vmem:[%s3 + $0x48] sm:$0xff]
        %v893 = vld [vmem:[%s3 + $0x50] sm:$0xff]
        %v894 = vld [vmem:[%s3 + $0x58] sm:$0xff]
        %v895 = vld [vmem:[%s3 + $0x60] sm:$0xff]
        %v896 = vld [vmem:[%s3 + $0x68] sm:$0xff]
        %v897 = vld [vmem:[%s3 + $0x70] sm:$0xff]
        %v898 = vld [vmem:[%s3 + $0x78] sm:$0xff]
        %s899 = scalar_lea.vmem %s3, 128
        %v900 = vld [vmem:[%s899] sm:$0xff]
        %v901 = vld [vmem:[%s899 + $0x8] sm:$0xff]
        %v902 = vld [vmem:[%s899 + $0x10] sm:$0xff]
        %v903 = vld [vmem:[%s899 + $0x18] sm:$0xff]
        %v904 = vld [vmem:[%s899 + $0x20] sm:$0xff]
        %v905 = vld [vmem:[%s899 + $0x28] sm:$0xff]
        %v906 = vld [vmem:[%s899 + $0x30] sm:$0xff]
        %v907 = vld [vmem:[%s899 + $0x38] sm:$0xff]
        %v908 = vld [vmem:[%s899 + $0x40] sm:$0xff]
        %v909 = vld [vmem:[%s899 + $0x48] sm:$0xff]
        %v910 = vld [vmem:[%s899 + $0x50] sm:$0xff]
        %v911 = vld [vmem:[%s899 + $0x58] sm:$0xff]
        %v912 = vld [vmem:[%s899 + $0x60] sm:$0xff]
        %v913 = vld [vmem:[%s899 + $0x68] sm:$0xff]
        %v914 = vld [vmem:[%s899 + $0x70] sm:$0xff]
        %v915 = vld [vmem:[%s899 + $0x78] sm:$0xff]
        %916 = vmatprep.subr.mxu0 0.0
        %917 = vmatpush1.msra.mxu0 %v900
        %918 = vmatprep.subr.mxu0 0.0
        %919 = vmatpush1.msra.mxu0 %v901
        %920 = vmatprep.subr.mxu0 0.0
        %921 = vmatpush1.msra.mxu0 %v902
        %922 = vmatprep.subr.mxu0 0.0
        %923 = vmatpush1.msra.mxu0 %v903
        %924 = vmatprep.subr.mxu0 0.0
        %925 = vmatpush1.msra.mxu0 %v904
        %926 = vmatprep.subr.mxu0 0.0
        %927 = vmatpush1.msra.mxu0 %v905
        %928 = vmatprep.subr.mxu0 0.0
        %929 = vmatpush1.msra.mxu0 %v906
        %930 = vmatprep.subr.mxu0 0.0
        %931 = vmatpush1.msra.mxu0 %v907
        %932 = vmatprep.subr.mxu0 0.0
        %933 = vmatpush1.msra.mxu0 %v908
        %934 = vmatprep.subr.mxu0 0.0
        %935 = vmatpush1.msra.mxu0 %v909
        %936 = vmatprep.subr.mxu0 0.0
        %937 = vmatpush1.msra.mxu0 %v910
        %938 = vmatprep.subr.mxu0 0.0
        %939 = vmatpush1.msra.mxu0 %v911
        %940 = vmatprep.subr.mxu0 0.0
        %941 = vmatpush1.msra.mxu0 %v912
        %942 = vmatprep.subr.mxu0 0.0
        %943 = vmatpush1.msra.mxu0 %v913
        %944 = vmatprep.subr.mxu0 0.0
        %945 = vmatpush1.msra.mxu0 %v914
        %946 = vmatprep.subr.mxu0 0.0
        %947 = vmatpush1.msra.mxu0 %v915
        %948 = vmatprep.subr.mxu0 0.0
        %949 = vmatpush1.msra.mxu0 0.0
        %950 = vmatprep.subr.mxu0 0.0
        %951 = vmatpush1.msra.mxu0 0.0
        %952 = vmatprep.subr.mxu0 0.0
        %953 = vmatpush1.msra.mxu0 0.0
        %954 = vmatprep.subr.mxu0 0.0
        %955 = vmatpush1.msra.mxu0 0.0
        %956 = vmatprep.subr.mxu0 0.0
        %957 = vmatpush1.msra.mxu0 0.0
        %958 = vmatprep.subr.mxu0 0.0
        %959 = vmatpush1.msra.mxu0 0.0
        %960 = vmatprep.subr.mxu0 0.0
        %961 = vmatpush1.msra.mxu0 0.0
        %962 = vmatprep.subr.mxu0 0.0
        %963 = vmatpush1.msra.mxu0 0.0
        %964 = vmatprep.subr.mxu0 0.0
        %965 = vmatpush1.msra.mxu0 0.0
        %966 = vmatprep.subr.mxu0 0.0
        %967 = vmatpush1.msra.mxu0 0.0
        %968 = vmatprep.subr.mxu0 0.0
        %969 = vmatpush1.msra.mxu0 0.0
        %970 = vmatprep.subr.mxu0 0.0
        %971 = vmatpush1.msra.mxu0 0.0
        %972 = vmatprep.subr.mxu0 0.0
        %973 = vmatpush1.msra.mxu0 0.0
        %974 = vmatprep.subr.mxu0 0.0
        %975 = vmatpush1.msra.mxu0 0.0
        %976 = vmatprep.subr.mxu0 0.0
        %977 = vmatpush1.msra.mxu0 0.0
        %978 = vmatprep.subr.mxu0 0.0
        %979 = vmatpush1.msra.mxu0 0.0
        %980 = vmatprep.mubr.f32.mxu0 0.0
        %981 = vmatmul.mubr.f32.gmra.mrb[0].mxu0 %v874
        %v982 = vpop.f32.mrb[0].mxu0
        %v983 = vadd.f32 0.0, %v982
        %v984 = vpop.f32.mrb[0].mxu0
        %985 = vmatprep.mubr.f32.mxu0 0.0
        %986 = vmatmul.mubr.f32.gmra.mrb[0].mxu0 %v876
        %v987 = vpop.f32.mrb[0].mxu0
        %v988 = vadd.f32 0.0, %v987
        %v989 = vpop.f32.mrb[0].mxu0
        %990 = vmatprep.mubr.f32.mxu0 0.0
        %991 = vmatmul.mubr.f32.gmra.mrb[0].mxu0 %v878
        %v992 = vpop.f32.mrb[0].mxu0
        %v993 = vadd.f32 0.0, %v992
        %v994 = vpop.f32.mrb[0].mxu0
        %995 = vmatprep.mubr.f32.mxu0 0.0
        %996 = vmatmul.mubr.f32.gmra.mrb[0].mxu0 %v880
        %v997 = vpop.f32.mrb[0].mxu0
        %v998 = vadd.f32 0.0, %v997
        %v999 = vpop.f32.mrb[0].mxu0
        %1000 = vmatprep.mubr.f32.mxu0 0.0
        %1001 = vmatmul.mubr.f32.gmra.mrb[0].mxu0 %v882
        %v1002 = vpop.f32.mrb[0].mxu0
        %v1003 = vadd.f32 0.0, %v1002
        %v1004 = vpop.f32.mrb[0].mxu0
        %1005 = vdwg.mxu0
        %1006 = vmatprep.subr.mxu0 0.0
        %1007 = vmatpush1.msra.mxu0 %v883
        %1008 = vmatprep.subr.mxu0 0.0
        %1009 = vmatpush1.msra.mxu0 %v884
        %1010 = vmatprep.subr.mxu0 0.0
        %1011 = vmatpush1.msra.mxu0 %v885
        %1012 = vmatprep.subr.mxu0 0.0
        %1013 = vmatpush1.msra.mxu0 %v886
        %1014 = vmatprep.subr.mxu0 0.0
        %1015 = vmatpush1.msra.mxu0 %v887
        %1016 = vmatprep.subr.mxu0 0.0
        %1017 = vmatpush1.msra.mxu0 %v888
        %1018 = vmatprep.subr.mxu0 0.0
        %1019 = vmatpush1.msra.mxu0 %v889
        %1020 = vmatprep.subr.mxu0 0.0
        %1021 = vmatpush1.msra.mxu0 %v890
        %1022 = vmatprep.subr.mxu0 0.0
        %1023 = vmatpush1.msra.mxu0 %v891
        %1024 = vmatprep.subr.mxu0 0.0
        %1025 = vmatpush1.msra.mxu0 %v892
        %1026 = vmatprep.subr.mxu0 0.0
        %1027 = vmatpush1.msra.mxu0 %v893
        %1028 = vmatprep.subr.mxu0 0.0
        %1029 = vmatpush1.msra.mxu0 %v894
        %1030 = vmatprep.subr.mxu0 0.0
        %1031 = vmatpush1.msra.mxu0 %v895
        %1032 = vmatprep.subr.mxu0 0.0
        %1033 = vmatpush1.msra.mxu0 %v896
        %1034 = vmatprep.subr.mxu0 0.0
        %1035 = vmatpush1.msra.mxu0 %v897
        %1036 = vmatprep.subr.mxu0 0.0
        %1037 = vmatpush1.msra.mxu0 %v898
        %1038 = vmatprep.subr.mxu0 0.0
        %1039 = vmatpush1.msra.mxu0 0.0
        %1040 = vmatprep.subr.mxu0 0.0
        %1041 = vmatpush1.msra.mxu0 0.0
        %1042 = vmatprep.subr.mxu0 0.0
        %1043 = vmatpush1.msra.mxu0 0.0
        %1044 = vmatprep.subr.mxu0 0.0
        %1045 = vmatpush1.msra.mxu0 0.0
        %1046 = vmatprep.subr.mxu0 0.0
        %1047 = vmatpush1.msra.mxu0 0.0
        %1048 = vmatprep.subr.mxu0 0.0
        %1049 = vmatpush1.msra.mxu0 0.0
        %1050 = vmatprep.subr.mxu0 0.0
        %1051 = vmatpush1.msra.mxu0 0.0
        %1052 = vmatprep.subr.mxu0 0.0
        %1053 = vmatpush1.msra.mxu0 0.0
        %1054 = vmatprep.subr.mxu0 0.0
        %1055 = vmatpush1.msra.mxu0 0.0
        %1056 = vmatprep.subr.mxu0 0.0
        %1057 = vmatpush1.msra.mxu0 0.0
        %1058 = vmatprep.subr.mxu0 0.0
        %1059 = vmatpush1.msra.mxu0 0.0
        %1060 = vmatprep.subr.mxu0 0.0
        %1061 = vmatpush1.msra.mxu0 0.0
        %1062 = vmatprep.subr.mxu0 0.0
        %1063 = vmatpush1.msra.mxu0 0.0
        %1064 = vmatprep.subr.mxu0 0.0
        %1065 = vmatpush1.msra.mxu0 0.0
        %1066 = vmatprep.subr.mxu0 0.0
        %1067 = vmatpush1.msra.mxu0 0.0
        %1068 = vmatprep.subr.mxu0 0.0
        %1069 = vmatpush1.msra.mxu0 0.0
        %1070 = vmatprep.mubr.f32.mxu0 0.0
        %1071 = vmatmul.mubr.f32.gmra.mrb[0].mxu0 %v864
        %v1072 = vpop.f32.mrb[0].mxu0
        %v1073 = vadd.f32 %v983, %v1072
        %v1074 = vpop.f32.mrb[0].mxu0
        %1075 = vmatprep.mubr.f32.mxu0 0.0
        %1076 = vmatmul.mubr.f32.gmra.mrb[0].mxu0 %v866
        %v1077 = vpop.f32.mrb[0].mxu0
        %v1078 = vadd.f32 %v988, %v1077
        %v1079 = vpop.f32.mrb[0].mxu0
        %1080 = vmatprep.mubr.f32.mxu0 0.0
        %1081 = vmatmul.mubr.f32.gmra.mrb[0].mxu0 %v868
        %v1082 = vpop.f32.mrb[0].mxu0
        %v1083 = vadd.f32 %v993, %v1082
        %v1084 = vpop.f32.mrb[0].mxu0
        %1085 = vmatprep.mubr.f32.mxu0 0.0
        %1086 = vmatmul.mubr.f32.gmra.mrb[0].mxu0 %v870
        %v1087 = vpop.f32.mrb[0].mxu0
        %v1088 = vadd.f32 %v998, %v1087
        %v1089 = vpop.f32.mrb[0].mxu0
        %1090 = vmatprep.mubr.f32.mxu0 0.0
        %1091 = vmatmul.mubr.f32.gmra.mrb[0].mxu0 %v872
        %v1092 = vpop.f32.mrb[0].mxu0
        %v1093 = vadd.f32 %v1003, %v1092
        %v1094 = vpop.f32.mrb[0].mxu0
        %1095 = vdwg.mxu0
        %s1096 = scalar_lea.vmem %s3, 256
        %v1097 = vld [vmem:[%s1096] sm:$0xff]
        %v1098 = vld [vmem:[%s1096 + $0x8] sm:$0xff]
        %v1099 = vld [vmem:[%s1096 + $0x10] sm:$0xff]
        %v1100 = vld [vmem:[%s1096 + $0x18] sm:$0xff]
        %v1101 = vld [vmem:[%s1096 + $0x20] sm:$0xff]
        %v1102 = vld [vmem:[%s1096 + $0x28] sm:$0xff]
        %v1103 = vld [vmem:[%s1096 + $0x30] sm:$0xff]
        %v1104 = vld [vmem:[%s1096 + $0x38] sm:$0xff]
        %v1105 = vld [vmem:[%s1096 + $0x40] sm:$0xff]
        %v1106 = vld [vmem:[%s1096 + $0x48] sm:$0xff]
        %v1107 = vld [vmem:[%s1096 + $0x50] sm:$0xff]
        %v1108 = vld [vmem:[%s1096 + $0x58] sm:$0xff]
        %v1109 = vld [vmem:[%s1096 + $0x60] sm:$0xff]
        %v1110 = vld [vmem:[%s1096 + $0x68] sm:$0xff]
        %v1111 = vld [vmem:[%s1096 + $0x70] sm:$0xff]
        %v1112 = vld [vmem:[%s1096 + $0x78] sm:$0xff]
        %v1118 = vrot.slane %v864, 1
        %v1119 = vrot.slane %v866, 1
        %v1120 = vsel %vm682, %v1118, %v1119
        %v1121 = vrot.slane %v868, 1
        %v1122 = vsel %vm682, %v1119, %v1121
        %v1123 = vrot.slane %v870, 1
        %v1124 = vsel %vm682, %v1121, %v1123
        %v1125 = vrot.slane %v872, 1
        %v1126 = vsel %vm682, %v1123, %v1125
        %1132 = vmatprep.subr.mxu0 0.0
        %1133 = vmatpush1.msra.mxu0 %v1097
        %1134 = vmatprep.subr.mxu0 0.0
        %1135 = vmatpush1.msra.mxu0 %v1098
        %1136 = vmatprep.subr.mxu0 0.0
        %1137 = vmatpush1.msra.mxu0 %v1099
        %1138 = vmatprep.subr.mxu0 0.0
        %1139 = vmatpush1.msra.mxu0 %v1100
        %1140 = vmatprep.subr.mxu0 0.0
        %1141 = vmatpush1.msra.mxu0 %v1101
        %1142 = vmatprep.subr.mxu0 0.0
        %1143 = vmatpush1.msra.mxu0 %v1102
        %1144 = vmatprep.subr.mxu0 0.0
        %1145 = vmatpush1.msra.mxu0 %v1103
        %1146 = vmatprep.subr.mxu0 0.0
        %1147 = vmatpush1.msra.mxu0 %v1104
        %1148 = vmatprep.subr.mxu0 0.0
        %1149 = vmatpush1.msra.mxu0 %v1105
        %1150 = vmatprep.subr.mxu0 0.0
        %1151 = vmatpush1.msra.mxu0 %v1106
        %1152 = vmatprep.subr.mxu0 0.0
        %1153 = vmatpush1.msra.mxu0 %v1107
        %1154 = vmatprep.subr.mxu0 0.0
        %1155 = vmatpush1.msra.mxu0 %v1108
        %1156 = vmatprep.subr.mxu0 0.0
        %1157 = vmatpush1.msra.mxu0 %v1109
        %1158 = vmatprep.subr.mxu0 0.0
        %1159 = vmatpush1.msra.mxu0 %v1110
        %1160 = vmatprep.subr.mxu0 0.0
        %1161 = vmatpush1.msra.mxu0 %v1111
        %1162 = vmatprep.subr.mxu0 0.0
        %1163 = vmatpush1.msra.mxu0 %v1112
        %1164 = vmatprep.subr.mxu0 0.0
        %1165 = vmatpush1.msra.mxu0 0.0
        %1166 = vmatprep.subr.mxu0 0.0
        %1167 = vmatpush1.msra.mxu0 0.0
        %1168 = vmatprep.subr.mxu0 0.0
        %1169 = vmatpush1.msra.mxu0 0.0
        %1170 = vmatprep.subr.mxu0 0.0
        %1171 = vmatpush1.msra.mxu0 0.0
        %1172 = vmatprep.subr.mxu0 0.0
        %1173 = vmatpush1.msra.mxu0 0.0
        %1174 = vmatprep.subr.mxu0 0.0
        %1175 = vmatpush1.msra.mxu0 0.0
        %1176 = vmatprep.subr.mxu0 0.0
        %1177 = vmatpush1.msra.mxu0 0.0
        %1178 = vmatprep.subr.mxu0 0.0
        %1179 = vmatpush1.msra.mxu0 0.0
        %1180 = vmatprep.subr.mxu0 0.0
        %1181 = vmatpush1.msra.mxu0 0.0
        %1182 = vmatprep.subr.mxu0 0.0
        %1183 = vmatpush1.msra.mxu0 0.0
        %1184 = vmatprep.subr.mxu0 0.0
        %1185 = vmatpush1.msra.mxu0 0.0
        %1186 = vmatprep.subr.mxu0 0.0
        %1187 = vmatpush1.msra.mxu0 0.0
        %1188 = vmatprep.subr.mxu0 0.0
        %1189 = vmatpush1.msra.mxu0 0.0
        %1190 = vmatprep.subr.mxu0 0.0
        %1191 = vmatpush1.msra.mxu0 0.0
        %1192 = vmatprep.subr.mxu0 0.0
        %1193 = vmatpush1.msra.mxu0 0.0
        %1194 = vmatprep.subr.mxu0 0.0
        %1195 = vmatpush1.msra.mxu0 0.0
        %1196 = vmatprep.mubr.f32.mxu0 0.0
        %1197 = vmatmul.mubr.f32.gmra.mrb[0].mxu0 %v1120
        %v1198 = vpop.f32.mrb[0].mxu0
        %v1199 = vadd.f32 0.0, %v1198
        %v1200 = vpop.f32.mrb[0].mxu0
        %1201 = vmatprep.mubr.f32.mxu0 0.0
        %1202 = vmatmul.mubr.f32.gmra.mrb[0].mxu0 %v1122
        %v1203 = vpop.f32.mrb[0].mxu0
        %v1204 = vadd.f32 0.0, %v1203
        %v1205 = vpop.f32.mrb[0].mxu0
        %1206 = vmatprep.mubr.f32.mxu0 0.0
        %1207 = vmatmul.mubr.f32.gmra.mrb[0].mxu0 %v1124
        %v1208 = vpop.f32.mrb[0].mxu0
        %v1209 = vadd.f32 0.0, %v1208
        %v1210 = vpop.f32.mrb[0].mxu0
        %1211 = vmatprep.mubr.f32.mxu0 0.0
        %1212 = vmatmul.mubr.f32.gmra.mrb[0].mxu0 %v1126
        %v1213 = vpop.f32.mrb[0].mxu0
        %v1214 = vadd.f32 0.0, %v1213
        %v1215 = vpop.f32.mrb[0].mxu0
        %1216 = vmatprep.mubr.f32.mxu0 0.0
        %1217 = vmatmul.mubr.f32.gmra.mrb[0].mxu0 %v1125
        %v1218 = vpop.f32.mrb[0].mxu0
        %v1219 = vadd.f32 0.0, %v1218
        %v1220 = vpop.f32.mrb[0].mxu0
        %1221 = vdwg.mxu0
        %v1222 = vadd.f32 %v1073, %v1199
        %v1223 = vadd.f32 %v1078, %v1204
        %v1224 = vadd.f32 %v1083, %v1209
        %v1225 = vadd.f32 %v1088, %v1214
        %v1226 = vadd.f32 %v1093, %v1219
        %v1227 = vld [vmem:[%s4] sm:$0x1]
        %v1229 = vlaneseq
        %v1230 = vshrl.u32 %v1229, 7
        %v1231 = vsub.s32 0, %v1230
        %v1232 = vrot.slane %v1227, %v1231
        %v1234 = vadd.f32 %v1222, %v1232
        %v1235 = vadd.f32 %v1223, %v1232
        %v1236 = vadd.f32 %v1224, %v1232
        %v1237 = vadd.f32 %v1225, %v1232
        %v1238 = vadd.f32 %v1226, %v1232
        %v1239 = vmax.f32 %v1234, 0.0
        %v1240 = vmax.f32 %v1235, 0.0
        %v1241 = vmax.f32 %v1236, 0.0
        %v1242 = vmax.f32 %v1237, 0.0
        %v1243 = vmax.f32 %v1238, 0.0
        %1244 = vst [vmem:[#allocation4 + $0x1] sm:$0xff] %v1239
        %1245 = vst [vmem:[#allocation4 + $0xa] sm:$0xfe] %v1240
        %1246 = vst [vmem:[#allocation4 + $0x12] sm:$0x1] %v1241
        %1247 = vst [vmem:[#allocation4 + $0x13] sm:$0xfc] %v1241
        %1248 = vst [vmem:[#allocation4 + $0x1b] sm:$0x3] %v1242
        %1249 = vst [vmem:[#allocation4 + $0x1c] sm:$0xf8] %v1242
        %1250 = vst [vmem:[#allocation4 + $0x24] sm:$0x7] %v1243
        %v1251 = vld [vmem:[#allocation4] ss:$2 sm:$0xff]
        %s1252 = scalar_lea.vmem [#allocation4], 16
        %v1253 = vld [vmem:[%s1252] ss:$2 sm:$0xff]
        %s1254 = scalar_lea.vmem [#allocation4], 32
        %v1255 = vld [vmem:[%s1254] ss:$2 sm:$0xf]
        %s1256 = scalar_lea.vmem [#allocation4], 1
        %v1257 = vld [vmem:[%s1256] ss:$2 sm:$0xff]
        %s1258 = scalar_lea.vmem [#allocation4], 17
        %v1259 = vld [vmem:[%s1258] ss:$2 sm:$0xff]
        %s1260 = scalar_lea.vmem [#allocation4], 33
        %v1261 = vld [vmem:[%s1260] ss:$2 sm:$0xf]
        %v1262 = vld [vmem:[%s5] sm:$0xff]
        %v1263 = vld [vmem:[%s5 + $0x8] sm:$0xff]
        %v1264 = vld [vmem:[%s5 + $0x10] sm:$0xff]
        %v1265 = vld [vmem:[%s5 + $0x18] sm:$0xff]
        %v1266 = vld [vmem:[%s5 + $0x20] sm:$0xff]
        %v1267 = vld [vmem:[%s5 + $0x28] sm:$0xff]
        %v1268 = vld [vmem:[%s5 + $0x30] sm:$0xff]
        %v1269 = vld [vmem:[%s5 + $0x38] sm:$0xff]
        %v1270 = vld [vmem:[%s5 + $0x40] sm:$0xff]
        %v1271 = vld [vmem:[%s5 + $0x48] sm:$0xff]
        %v1272 = vld [vmem:[%s5 + $0x50] sm:$0xff]
        %v1273 = vld [vmem:[%s5 + $0x58] sm:$0xff]
        %v1274 = vld [vmem:[%s5 + $0x60] sm:$0xff]
        %v1275 = vld [vmem:[%s5 + $0x68] sm:$0xff]
        %v1276 = vld [vmem:[%s5 + $0x70] sm:$0xff]
        %v1277 = vld [vmem:[%s5 + $0x78] sm:$0xff]
        %s1278 = scalar_lea.vmem %s5, 128
        %v1279 = vld [vmem:[%s1278] sm:$0xff]
        %v1280 = vld [vmem:[%s1278 + $0x8] sm:$0xff]
        %v1281 = vld [vmem:[%s1278 + $0x10] sm:$0xff]
        %v1282 = vld [vmem:[%s1278 + $0x18] sm:$0xff]
        %v1283 = vld [vmem:[%s1278 + $0x20] sm:$0xff]
        %v1284 = vld [vmem:[%s1278 + $0x28] sm:$0xff]
        %v1285 = vld [vmem:[%s1278 + $0x30] sm:$0xff]
        %v1286 = vld [vmem:[%s1278 + $0x38] sm:$0xff]
        %v1287 = vld [vmem:[%s1278 + $0x40] sm:$0xff]
        %v1288 = vld [vmem:[%s1278 + $0x48] sm:$0xff]
        %v1289 = vld [vmem:[%s1278 + $0x50] sm:$0xff]
        %v1290 = vld [vmem:[%s1278 + $0x58] sm:$0xff]
        %v1291 = vld [vmem:[%s1278 + $0x60] sm:$0xff]
        %v1292 = vld [vmem:[%s1278 + $0x68] sm:$0xff]
        %v1293 = vld [vmem:[%s1278 + $0x70] sm:$0xff]
        %v1294 = vld [vmem:[%s1278 + $0x78] sm:$0xff]
        %1295 = vmatprep.subr.mxu0 0.0
        %1296 = vmatpush1.msra.mxu0 %v1279
        %1297 = vmatprep.subr.mxu0 0.0
        %1298 = vmatpush1.msra.mxu0 %v1280
        %1299 = vmatprep.subr.mxu0 0.0
        %1300 = vmatpush1.msra.mxu0 %v1281
        %1301 = vmatprep.subr.mxu0 0.0
        %1302 = vmatpush1.msra.mxu0 %v1282
        %1303 = vmatprep.subr.mxu0 0.0
        %1304 = vmatpush1.msra.mxu0 %v1283
        %1305 = vmatprep.subr.mxu0 0.0
        %1306 = vmatpush1.msra.mxu0 %v1284
        %1307 = vmatprep.subr.mxu0 0.0
        %1308 = vmatpush1.msra.mxu0 %v1285
        %1309 = vmatprep.subr.mxu0 0.0
        %1310 = vmatpush1.msra.mxu0 %v1286
        %1311 = vmatprep.subr.mxu0 0.0
        %1312 = vmatpush1.msra.mxu0 %v1287
        %1313 = vmatprep.subr.mxu0 0.0
        %1314 = vmatpush1.msra.mxu0 %v1288
        %1315 = vmatprep.subr.mxu0 0.0
        %1316 = vmatpush1.msra.mxu0 %v1289
        %1317 = vmatprep.subr.mxu0 0.0
        %1318 = vmatpush1.msra.mxu0 %v1290
        %1319 = vmatprep.subr.mxu0 0.0
        %1320 = vmatpush1.msra.mxu0 %v1291
        %1321 = vmatprep.subr.mxu0 0.0
        %1322 = vmatpush1.msra.mxu0 %v1292
        %1323 = vmatprep.subr.mxu0 0.0
        %1324 = vmatpush1.msra.mxu0 %v1293
        %1325 = vmatprep.subr.mxu0 0.0
        %1326 = vmatpush1.msra.mxu0 %v1294
        %1327 = vmatprep.subr.mxu0 0.0
        %1328 = vmatpush1.msra.mxu0 0.0
        %1329 = vmatprep.subr.mxu0 0.0
        %1330 = vmatpush1.msra.mxu0 0.0
        %1331 = vmatprep.subr.mxu0 0.0
        %1332 = vmatpush1.msra.mxu0 0.0
        %1333 = vmatprep.subr.mxu0 0.0
        %1334 = vmatpush1.msra.mxu0 0.0
        %1335 = vmatprep.subr.mxu0 0.0
        %1336 = vmatpush1.msra.mxu0 0.0
        %1337 = vmatprep.subr.mxu0 0.0
        %1338 = vmatpush1.msra.mxu0 0.0
        %1339 = vmatprep.subr.mxu0 0.0
        %1340 = vmatpush1.msra.mxu0 0.0
        %1341 = vmatprep.subr.mxu0 0.0
        %1342 = vmatpush1.msra.mxu0 0.0
        %1343 = vmatprep.subr.mxu0 0.0
        %1344 = vmatpush1.msra.mxu0 0.0
        %1345 = vmatprep.subr.mxu0 0.0
        %1346 = vmatpush1.msra.mxu0 0.0
        %1347 = vmatprep.subr.mxu0 0.0
        %1348 = vmatpush1.msra.mxu0 0.0
        %1349 = vmatprep.subr.mxu0 0.0
        %1350 = vmatpush1.msra.mxu0 0.0
        %1351 = vmatprep.subr.mxu0 0.0
        %1352 = vmatpush1.msra.mxu0 0.0
        %1353 = vmatprep.subr.mxu0 0.0
        %1354 = vmatpush1.msra.mxu0 0.0
        %1355 = vmatprep.subr.mxu0 0.0
        %1356 = vmatpush1.msra.mxu0 0.0
        %1357 = vmatprep.subr.mxu0 0.0
        %1358 = vmatpush1.msra.mxu0 0.0
        %1359 = vmatprep.mubr.f32.mxu0 0.0
        %1360 = vmatmul.mubr.f32.gmra.mrb[0].mxu0 %v1257
        %v1361 = vpop.f32.mrb[0].mxu0
        %v1362 = vadd.f32 0.0, %v1361
        %v1363 = vpop.f32.mrb[0].mxu0
        %1364 = vmatprep.mubr.f32.mxu0 0.0
        %1365 = vmatmul.mubr.f32.gmra.mrb[0].mxu0 %v1259
        %v1366 = vpop.f32.mrb[0].mxu0
        %v1367 = vadd.f32 0.0, %v1366
        %v1368 = vpop.f32.mrb[0].mxu0
        %1369 = vmatprep.mubr.f32.mxu0 0.0
        %1370 = vmatmul.mubr.f32.gmra.mrb[0].mxu0 %v1261
        %v1371 = vpop.f32.mrb[0].mxu0
        %v1372 = vadd.f32 0.0, %v1371
        %v1373 = vpop.f32.mrb[0].mxu0
        %1374 = vdwg.mxu0
        %1375 = vmatprep.subr.mxu0 0.0
        %1376 = vmatpush1.msra.mxu0 %v1262
        %1377 = vmatprep.subr.mxu0 0.0
        %1378 = vmatpush1.msra.mxu0 %v1263
        %1379 = vmatprep.subr.mxu0 0.0
        %1380 = vmatpush1.msra.mxu0 %v1264
        %1381 = vmatprep.subr.mxu0 0.0
        %1382 = vmatpush1.msra.mxu0 %v1265
        %1383 = vmatprep.subr.mxu0 0.0
        %1384 = vmatpush1.msra.mxu0 %v1266
        %1385 = vmatprep.subr.mxu0 0.0
        %1386 = vmatpush1.msra.mxu0 %v1267
        %1387 = vmatprep.subr.mxu0 0.0
        %1388 = vmatpush1.msra.mxu0 %v1268
        %1389 = vmatprep.subr.mxu0 0.0
        %1390 = vmatpush1.msra.mxu0 %v1269
        %1391 = vmatprep.subr.mxu0 0.0
        %1392 = vmatpush1.msra.mxu0 %v1270
        %1393 = vmatprep.subr.mxu0 0.0
        %1394 = vmatpush1.msra.mxu0 %v1271
        %1395 = vmatprep.subr.mxu0 0.0
        %1396 = vmatpush1.msra.mxu0 %v1272
        %1397 = vmatprep.subr.mxu0 0.0
        %1398 = vmatpush1.msra.mxu0 %v1273
        %1399 = vmatprep.subr.mxu0 0.0
        %1400 = vmatpush1.msra.mxu0 %v1274
        %1401 = vmatprep.subr.mxu0 0.0
        %1402 = vmatpush1.msra.mxu0 %v1275
        %1403 = vmatprep.subr.mxu0 0.0
        %1404 = vmatpush1.msra.mxu0 %v1276
        %1405 = vmatprep.subr.mxu0 0.0
        %1406 = vmatpush1.msra.mxu0 %v1277
        %1407 = vmatprep.subr.mxu0 0.0
        %1408 = vmatpush1.msra.mxu0 0.0
        %1409 = vmatprep.subr.mxu0 0.0
        %1410 = vmatpush1.msra.mxu0 0.0
        %1411 = vmatprep.subr.mxu0 0.0
        %1412 = vmatpush1.msra.mxu0 0.0
        %1413 = vmatprep.subr.mxu0 0.0
        %1414 = vmatpush1.msra.mxu0 0.0
        %1415 = vmatprep.subr.mxu0 0.0
        %1416 = vmatpush1.msra.mxu0 0.0
        %1417 = vmatprep.subr.mxu0 0.0
        %1418 = vmatpush1.msra.mxu0 0.0
        %1419 = vmatprep.subr.mxu0 0.0
        %1420 = vmatpush1.msra.mxu0 0.0
        %1421 = vmatprep.subr.mxu0 0.0
        %1422 = vmatpush1.msra.mxu0 0.0
        %1423 = vmatprep.subr.mxu0 0.0
        %1424 = vmatpush1.msra.mxu0 0.0
        %1425 = vmatprep.subr.mxu0 0.0
        %1426 = vmatpush1.msra.mxu0 0.0
        %1427 = vmatprep.subr.mxu0 0.0
        %1428 = vmatpush1.msra.mxu0 0.0
        %1429 = vmatprep.subr.mxu0 0.0
        %1430 = vmatpush1.msra.mxu0 0.0
        %1431 = vmatprep.subr.mxu0 0.0
        %1432 = vmatpush1.msra.mxu0 0.0
        %1433 = vmatprep.subr.mxu0 0.0
        %1434 = vmatpush1.msra.mxu0 0.0
        %1435 = vmatprep.subr.mxu0 0.0
        %1436 = vmatpush1.msra.mxu0 0.0
        %1437 = vmatprep.subr.mxu0 0.0
        %1438 = vmatpush1.msra.mxu0 0.0
        %1439 = vmatprep.mubr.f32.mxu0 0.0
        %1440 = vmatmul.mubr.f32.gmra.mrb[0].mxu0 %v1251
        %v1441 = vpop.f32.mrb[0].mxu0
        %v1442 = vadd.f32 %v1362, %v1441
        %v1443 = vpop.f32.mrb[0].mxu0
        %1444 = vmatprep.mubr.f32.mxu0 0.0
        %1445 = vmatmul.mubr.f32.gmra.mrb[0].mxu0 %v1253
        %v1446 = vpop.f32.mrb[0].mxu0
        %v1447 = vadd.f32 %v1367, %v1446
        %v1448 = vpop.f32.mrb[0].mxu0
        %1449 = vmatprep.mubr.f32.mxu0 0.0
        %1450 = vmatmul.mubr.f32.gmra.mrb[0].mxu0 %v1255
        %v1451 = vpop.f32.mrb[0].mxu0
        %v1452 = vadd.f32 %v1372, %v1451
        %v1453 = vpop.f32.mrb[0].mxu0
        %1454 = vdwg.mxu0
        %s1455 = scalar_lea.vmem %s5, 256
        %v1456 = vld [vmem:[%s1455] sm:$0xff]
        %v1457 = vld [vmem:[%s1455 + $0x8] sm:$0xff]
        %v1458 = vld [vmem:[%s1455 + $0x10] sm:$0xff]
        %v1459 = vld [vmem:[%s1455 + $0x18] sm:$0xff]
        %v1460 = vld [vmem:[%s1455 + $0x20] sm:$0xff]
        %v1461 = vld [vmem:[%s1455 + $0x28] sm:$0xff]
        %v1462 = vld [vmem:[%s1455 + $0x30] sm:$0xff]
        %v1463 = vld [vmem:[%s1455 + $0x38] sm:$0xff]
        %v1464 = vld [vmem:[%s1455 + $0x40] sm:$0xff]
        %v1465 = vld [vmem:[%s1455 + $0x48] sm:$0xff]
        %v1466 = vld [vmem:[%s1455 + $0x50] sm:$0xff]
        %v1467 = vld [vmem:[%s1455 + $0x58] sm:$0xff]
        %v1468 = vld [vmem:[%s1455 + $0x60] sm:$0xff]
        %v1469 = vld [vmem:[%s1455 + $0x68] sm:$0xff]
        %v1470 = vld [vmem:[%s1455 + $0x70] sm:$0xff]
        %v1471 = vld [vmem:[%s1455 + $0x78] sm:$0xff]
        %v1475 = vrot.slane %v1251, 1
        %v1476 = vrot.slane %v1253, 1
        %v1477 = vsel %vm682, %v1475, %v1476
        %v1478 = vrot.slane %v1255, 1
        %v1479 = vsel %vm682, %v1476, %v1478
        %1483 = vmatprep.subr.mxu0 0.0
        %1484 = vmatpush1.msra.mxu0 %v1456
        %1485 = vmatprep.subr.mxu0 0.0
        %1486 = vmatpush1.msra.mxu0 %v1457
        %1487 = vmatprep.subr.mxu0 0.0
        %1488 = vmatpush1.msra.mxu0 %v1458
        %1489 = vmatprep.subr.mxu0 0.0
        %1490 = vmatpush1.msra.mxu0 %v1459
        %1491 = vmatprep.subr.mxu0 0.0
        %1492 = vmatpush1.msra.mxu0 %v1460
        %1493 = vmatprep.subr.mxu0 0.0
        %1494 = vmatpush1.msra.mxu0 %v1461
        %1495 = vmatprep.subr.mxu0 0.0
        %1496 = vmatpush1.msra.mxu0 %v1462
        %1497 = vmatprep.subr.mxu0 0.0
        %1498 = vmatpush1.msra.mxu0 %v1463
        %1499 = vmatprep.subr.mxu0 0.0
        %1500 = vmatpush1.msra.mxu0 %v1464
        %1501 = vmatprep.subr.mxu0 0.0
        %1502 = vmatpush1.msra.mxu0 %v1465
        %1503 = vmatprep.subr.mxu0 0.0
        %1504 = vmatpush1.msra.mxu0 %v1466
        %1505 = vmatprep.subr.mxu0 0.0
        %1506 = vmatpush1.msra.mxu0 %v1467
        %1507 = vmatprep.subr.mxu0 0.0
        %1508 = vmatpush1.msra.mxu0 %v1468
        %1509 = vmatprep.subr.mxu0 0.0
        %1510 = vmatpush1.msra.mxu0 %v1469
        %1511 = vmatprep.subr.mxu0 0.0
        %1512 = vmatpush1.msra.mxu0 %v1470
        %1513 = vmatprep.subr.mxu0 0.0
        %1514 = vmatpush1.msra.mxu0 %v1471
        %1515 = vmatprep.subr.mxu0 0.0
        %1516 = vmatpush1.msra.mxu0 0.0
        %1517 = vmatprep.subr.mxu0 0.0
        %1518 = vmatpush1.msra.mxu0 0.0
        %1519 = vmatprep.subr.mxu0 0.0
        %1520 = vmatpush1.msra.mxu0 0.0
        %1521 = vmatprep.subr.mxu0 0.0
        %1522 = vmatpush1.msra.mxu0 0.0
        %1523 = vmatprep.subr.mxu0 0.0
        %1524 = vmatpush1.msra.mxu0 0.0
        %1525 = vmatprep.subr.mxu0 0.0
        %1526 = vmatpush1.msra.mxu0 0.0
        %1527 = vmatprep.subr.mxu0 0.0
        %1528 = vmatpush1.msra.mxu0 0.0
        %1529 = vmatprep.subr.mxu0 0.0
        %1530 = vmatpush1.msra.mxu0 0.0
        %1531 = vmatprep.subr.mxu0 0.0
        %1532 = vmatpush1.msra.mxu0 0.0
        %1533 = vmatprep.subr.mxu0 0.0
        %1534 = vmatpush1.msra.mxu0 0.0
        %1535 = vmatprep.subr.mxu0 0.0
        %1536 = vmatpush1.msra.mxu0 0.0
        %1537 = vmatprep.subr.mxu0 0.0
        %1538 = vmatpush1.msra.mxu0 0.0
        %1539 = vmatprep.subr.mxu0 0.0
        %1540 = vmatpush1.msra.mxu0 0.0
        %1541 = vmatprep.subr.mxu0 0.0
        %1542 = vmatpush1.msra.mxu0 0.0
        %1543 = vmatprep.subr.mxu0 0.0
        %1544 = vmatpush1.msra.mxu0 0.0
        %1545 = vmatprep.subr.mxu0 0.0
        %1546 = vmatpush1.msra.mxu0 0.0
        %1547 = vmatprep.mubr.f32.mxu0 0.0
        %1548 = vmatmul.mubr.f32.gmra.mrb[0].mxu0 %v1477
        %v1549 = vpop.f32.mrb[0].mxu0
        %v1550 = vadd.f32 0.0, %v1549
        %v1551 = vpop.f32.mrb[0].mxu0
        %1552 = vmatprep.mubr.f32.mxu0 0.0
        %1553 = vmatmul.mubr.f32.gmra.mrb[0].mxu0 %v1479
        %v1554 = vpop.f32.mrb[0].mxu0
        %v1555 = vadd.f32 0.0, %v1554
        %v1556 = vpop.f32.mrb[0].mxu0
        %1557 = vmatprep.mubr.f32.mxu0 0.0
        %1558 = vmatmul.mubr.f32.gmra.mrb[0].mxu0 %v1478
        %v1559 = vpop.f32.mrb[0].mxu0
        %v1560 = vadd.f32 0.0, %v1559
        %v1561 = vpop.f32.mrb[0].mxu0
        %1562 = vdwg.mxu0
        %v1563 = vadd.f32 %v1442, %v1550
        %v1564 = vadd.f32 %v1447, %v1555
        %v1565 = vadd.f32 %v1452, %v1560
        %v1566 = vld [vmem:[%s6] sm:$0x1]
        %v1568 = vlaneseq
        %v1569 = vshrl.u32 %v1568, 7
        %v1570 = vsub.s32 0, %v1569
        %v1571 = vrot.slane %v1566, %v1570
        %v1573 = vadd.f32 %v1563, %v1571
        %v1574 = vadd.f32 %v1564, %v1571
        %v1575 = vadd.f32 %v1565, %v1571
        %v1576 = vmax.f32 %v1573, 0.0
        %v1577 = vmax.f32 %v1574, 0.0
        %v1578 = vmax.f32 %v1575, 0.0
        %vm1579 = vcmask 1043456
        %v1580 = vsel %vm1579, %v1576, 0.0
        %v1581 = vrot.slane %v1580, 4
        %v1582 = vadd.f32 %v1580, %v1581
        %v1583 = vrot.slane %v1582, 2
        %v1584 = vadd.f32 %v1582, %v1583
        %v1585 = vrot.slane %v1584, 1
        %v1586 = vadd.f32 %v1584, %v1585
        %vm1589 = vcmask 1042432
        %v1590 = vrot.slane %v1576, 5
        %v1591 = vrot.slane %v1577, 5
        %v1592 = vsel %vm1589, %v1590, %v1591
        %v1594 = vsel %vm1579, %v1592, 0.0
        %v1595 = vrot.slane %v1594, 4
        %v1596 = vadd.f32 %v1594, %v1595
        %v1597 = vrot.slane %v1596, 2
        %v1598 = vadd.f32 %v1596, %v1597
        %v1599 = vrot.slane %v1598, 1
        %v1600 = vadd.f32 %v1598, %v1599
        %v1601 = vrot.slane %v1577, 2
        %v1603 = vsel %vm1579, %v1601, 0.0
        %v1604 = vrot.slane %v1603, 4
        %v1605 = vadd.f32 %v1603, %v1604
        %v1606 = vrot.slane %v1605, 2
        %v1607 = vadd.f32 %v1605, %v1606
        %v1608 = vrot.slane %v1607, 1
        %v1609 = vadd.f32 %v1607, %v1608
        %vm1611 = vcmask 1040384
        %v1612 = vrot.slane %v1577, 7
        %v1613 = vrot.slane %v1578, 7
        %v1614 = vsel %vm1611, %v1612, %v1613
        %v1616 = vsel %vm1579, %v1614, 0.0
        %v1617 = vrot.slane %v1616, 4
        %v1618 = vadd.f32 %v1616, %v1617
        %v1619 = vrot.slane %v1618, 2
        %v1620 = vadd.f32 %v1618, %v1619
        %v1621 = vrot.slane %v1620, 1
        %v1622 = vadd.f32 %v1620, %v1621
        %v1623 = vsel %vm1611, %v1586, %v1600
        %vm1624 = vcmask 1041408
        %v1625 = vsel %vm1624, %v1623, %v1609
        %v1626 = vsel %vm1589, %v1625, %v1622
        %v1627 = vld [vmem:[%s7] sm:$0xff]
        %v1628 = vld [vmem:[%s7 + $0x8] sm:$0xff]
        %v1629 = vld [vmem:[%s7 + $0x10] sm:$0xff]
        %v1630 = vld [vmem:[%s7 + $0x18] sm:$0xff]
        %v1631 = vld [vmem:[%s7 + $0x20] sm:$0xff]
        %v1632 = vld [vmem:[%s7 + $0x28] sm:$0xff]
        %v1633 = vld [vmem:[%s7 + $0x30] sm:$0xff]
        %v1634 = vld [vmem:[%s7 + $0x38] sm:$0xff]
        %v1635 = vld [vmem:[%s7 + $0x40] sm:$0xff]
        %v1636 = vld [vmem:[%s7 + $0x48] sm:$0xff]
        %v1637 = vld [vmem:[%s7 + $0x50] sm:$0xff]
        %v1638 = vld [vmem:[%s7 + $0x58] sm:$0xff]
        %v1639 = vld [vmem:[%s7 + $0x60] sm:$0xff]
        %v1640 = vld [vmem:[%s7 + $0x68] sm:$0xff]
        %v1641 = vld [vmem:[%s7 + $0x70] sm:$0xff]
        %v1642 = vld [vmem:[%s7 + $0x78] sm:$0xff]
        %1643 = vmatprep.subr.mxu0 0.0
        %1644 = vmatpush1.msra.mxu0 %v1627
        %1645 = vmatprep.subr.mxu0 0.0
        %1646 = vmatpush1.msra.mxu0 %v1628
        %1647 = vmatprep.subr.mxu0 0.0
        %1648 = vmatpush1.msra.mxu0 %v1629
        %1649 = vmatprep.subr.mxu0 0.0
        %1650 = vmatpush1.msra.mxu0 %v1630
        %1651 = vmatprep.subr.mxu0 0.0
        %1652 = vmatpush1.msra.mxu0 %v1631
        %1653 = vmatprep.subr.mxu0 0.0
        %1654 = vmatpush1.msra.mxu0 %v1632
        %1655 = vmatprep.subr.mxu0 0.0
        %1656 = vmatpush1.msra.mxu0 %v1633
        %1657 = vmatprep.subr.mxu0 0.0
        %1658 = vmatpush1.msra.mxu0 %v1634
        %1659 = vmatprep.subr.mxu0 0.0
        %1660 = vmatpush1.msra.mxu0 %v1635
        %1661 = vmatprep.subr.mxu0 0.0
        %1662 = vmatpush1.msra.mxu0 %v1636
        %1663 = vmatprep.subr.mxu0 0.0
        %1664 = vmatpush1.msra.mxu0 %v1637
        %1665 = vmatprep.subr.mxu0 0.0
        %1666 = vmatpush1.msra.mxu0 %v1638
        %1667 = vmatprep.subr.mxu0 0.0
        %1668 = vmatpush1.msra.mxu0 %v1639
        %1669 = vmatprep.subr.mxu0 0.0
        %1670 = vmatpush1.msra.mxu0 %v1640
        %1671 = vmatprep.subr.mxu0 0.0
        %1672 = vmatpush1.msra.mxu0 %v1641
        %1673 = vmatprep.subr.mxu0 0.0
        %1674 = vmatpush1.msra.mxu0 %v1642
        %1675 = vmatprep.subr.mxu0 0.0
        %1676 = vmatpush1.msra.mxu0 0.0
        %1677 = vmatprep.subr.mxu0 0.0
        %1678 = vmatpush1.msra.mxu0 0.0
        %1679 = vmatprep.subr.mxu0 0.0
        %1680 = vmatpush1.msra.mxu0 0.0
        %1681 = vmatprep.subr.mxu0 0.0
        %1682 = vmatpush1.msra.mxu0 0.0
        %1683 = vmatprep.subr.mxu0 0.0
        %1684 = vmatpush1.msra.mxu0 0.0
        %1685 = vmatprep.subr.mxu0 0.0
        %1686 = vmatpush1.msra.mxu0 0.0
        %1687 = vmatprep.subr.mxu0 0.0
        %1688 = vmatpush1.msra.mxu0 0.0
        %1689 = vmatprep.subr.mxu0 0.0
        %1690 = vmatpush1.msra.mxu0 0.0
        %1691 = vmatprep.subr.mxu0 0.0
        %1692 = vmatpush1.msra.mxu0 0.0
        %1693 = vmatprep.subr.mxu0 0.0
        %1694 = vmatpush1.msra.mxu0 0.0
        %1695 = vmatprep.subr.mxu0 0.0
        %1696 = vmatpush1.msra.mxu0 0.0
        %1697 = vmatprep.subr.mxu0 0.0
        %1698 = vmatpush1.msra.mxu0 0.0
        %1699 = vmatprep.subr.mxu0 0.0
        %1700 = vmatpush1.msra.mxu0 0.0
        %1701 = vmatprep.subr.mxu0 0.0
        %1702 = vmatpush1.msra.mxu0 0.0
        %1703 = vmatprep.subr.mxu0 0.0
        %1704 = vmatpush1.msra.mxu0 0.0
        %1705 = vmatprep.subr.mxu0 0.0
        %1706 = vmatpush1.msra.mxu0 0.0
        %1707 = vmatprep.mubr.f32.mxu0 0.0
        %1708 = vmatmul.mubr.f32.gmra.mrb[0].mxu0 %v1626
        %v1709 = vpop.f32.mrb[0].mxu0
        %v1710 = vadd.f32 0.0, %v1709
        %v1711 = vpop.f32.mrb[0].mxu0
        %1712 = vdwg.mxu0
        %vm1713 = vcmask 257024
        %1714 = vst.msk [vmem:[%s301] sm:$0xf] %vm1713, %v1710
        %s1715 = sand.u32 %s203, 1
        %s1716 = scalar_lea.sflag [#allocation6], %s1715
        %s1717 = sand.u32 %s203, 1
        %s1718 = smul.addr %s1717, 4
        %s1719 = scalar_lea.vmem [#allocation5], %s1718
        // Predicated region
        $region53: #{bblock_lowf_forward.1} parent=51 // pred_check
          %p1720 = pneg %p213
        $region54: #{bblock_lowf_forward.1} parent=51 // pred_check_branch
          %1722 = sbr.rel (%p1720) target = $region56
        $region55: #{bblock_lowf_forward.1} parent=51 // pred_region
          %s1724 = ssub.s32 64, 64
          %1725 = vsyncadd %s1716, %s1724
          %s1726 = smul.addr %s22, 64
          %s1727 = scalar_lea.hbm %s8, %s1726
          %s1729 = sshll.u32 %s1719, 4
          %s1730 = int_to_ptr.vmem [resolvable:$true] %s1729
          %1732 = dma.vmem_to_hbm [thread:$0]  %s1730, 64, %s1727, %s1716
        $region56: #{bblock_lowf_forward.1} parent=51 // pred_fallthru
          _
      $region52: #{bblock_lowf_forward.1} parent=5 // pred_fallthru
        _
      %p1733 = scmp.le.s32.totalorder 2, %s17
      // Predicated region
      $region57: #{bblock_lowf_forward.1} parent=5 // pred_check
        %p1734 = pneg %p1733
      $region58: #{bblock_lowf_forward.1} parent=5 // pred_check_branch
        %1736 = sbr.rel (%p1734) target = $region60
      $region59: #{bblock_lowf_forward.1} parent=5 // pred_region
        %s1737 = ssub.s32 %s17, 2
        // Predicated region
        $region61: #{bblock_lowf_forward.1} parent=59 // pred_check
          %p1738 = pneg %p219
        $region62: #{bblock_lowf_forward.1} parent=59 // pred_check_branch
          %1740 = sbr.rel (%p1738) target = $region64
        $region63: #{bblock_lowf_forward.1} parent=59 // pred_region
          %s1741 = sand.u32 %s204, 1
          %s1742 = scalar_lea.sflag [#allocation6], %s1741
          %s1743 = sand.u32 %s204, 1
          %s1744 = smul.addr %s1743, 4
          %s1745 = scalar_lea.vmem [#allocation5], %s1744
          %1746 = dma.done %s1742, 64
        $region64: #{bblock_lowf_forward.1} parent=59 // pred_fallthru
          _
      $region60: #{bblock_lowf_forward.1} parent=5 // pred_fallthru
        _
    $region6: #{bblock_lowf_forward.1} parent=1 // loop_footer
      %s21 = sadd.s32 1, %s17
    $region7: #{bblock_lowf_forward.1} parent=1 // loop_footer_branch
      %16 = sbr.rel target = $region3
    $region8: #{bblock_lowf_forward.1} parent=1 // loop_exit
      _
    %1747 = vsyncpa [#allocation6], 1
    %s1748 = scalar_lea.sflag [#allocation6], 1
    %1749 = vsyncpa %s1748, 1

</llo_original>
